<compile_context>
chip_gen: v5e
topology: v5e:2x2
jax: 0.10.0
libtpu: 0.0.40
codegen_flags: <defaults>
</compile_context>

<pallas_src>
import functools

import jax
import jax.numpy as jnp
from jax.experimental import pallas as pl
from jax.experimental.pallas import tpu as pltpu


# ----------------------------------------------------------------------------
# Fused kernel: full InceptionB forward for B_blk batch elements.
# ----------------------------------------------------------------------------
def _inception_b_kernel(x_ref,
                        w3_ref, s3_ref, t3_ref,   # branch3x3   (k=3, s=2)
                        w1_ref, s1_ref, t1_ref,   # dbl_1       (k=1)
                        w2_ref, s2_ref, t2_ref,   # dbl_2       (k=3, pad=1)
                        wd_ref, sd_ref, td_ref,   # dbl_3       (k=3, s=2)
                        o_ref, *, Cin, H, Lo, C_pad, B_blk):
    """x_ref: (B_blk, H, 2*Cin) bf16 space-to-depth input; row r of element b
    holds [x[b, 2r], x[b, 2r+1]].

    o_ref: (B_blk, Lo, C_pad) channels-last output slab:
           [0:384] branch3x3 | [384:480] branch3x3dbl | [480:480+Cin] pool | 0-pad.
    """
    B = B_blk
    xs = x_ref[...]                               # bf16, cast once in wrapper
    xe = xs[:, :, :Cin]                           # even positions 0, 2, ..., L-2
    xo = xs[:, :, Cin:]                           # odd  positions 1, 3, ..., L-1

    def mm(a, w_ref):
        # bf16 operands, f32 accumulation on the MXU.
        return jnp.dot(a, w_ref[...], preferred_element_type=jnp.float32)

    def bn_relu(acc, s_ref, t_ref):
        # Folded BN scale/shift + ReLU, f32 on the VPU.
        return jnp.maximum(acc * s_ref[...] + t_ref[...], 0.0)

    # ---- branch3x3: conv k=3 s=2 as ONE im2col matmul (B*Lo,3Cin)@(3Cin,384)
    a3 = jnp.concatenate([xe[:, :Lo], xo[:, :Lo], xe[:, 1:Lo + 1]],
                         axis=-1).reshape(B * Lo, 3 * Cin)          # bf16
    b3 = bn_relu(mm(a3, w3_ref), s3_ref, t3_ref)                    # (B*Lo, 384)

    # ---- branch_pool: max_pool1d k=3 s=2 over the same contiguous windows
    pool = jnp.maximum(jnp.maximum(xe[:, :Lo], xo[:, :Lo]),
                       xe[:, 1:Lo + 1]).reshape(B * Lo, Cin)        # bf16

    # ---- dbl_1: 1x1 conv on every position (even/odd stacked -> one matmul)
    x_eo = jnp.concatenate([xe, xo], axis=1).reshape(B * 2 * H, Cin)
    d1 = bn_relu(mm(x_eo, w1_ref), s1_ref, t1_ref).astype(jnp.bfloat16)
    C1 = d1.shape[-1]
    d1 = d1.reshape(B, 2 * H, C1)
    d1e, d1o = d1[:, :H], d1[:, H:]                                 # (B, H, C1)

    # ---- dbl_2: conv k=3 s=1 pad=1, kept in even/odd (space-to-depth) form;
    #      the pad=1 halo is handled in-register with zero rows (post-ReLU d1).
    zrow = jnp.zeros((B, 1, C1), jnp.bfloat16)
    d1o_prev = jnp.concatenate([zrow, d1o[:, :H - 1]], axis=1)      # d1[2r-1]
    d1e_next = jnp.concatenate([d1e[:, 1:], zrow], axis=1)          # d1[2r+2]
    a2 = jnp.concatenate(
        [jnp.concatenate([d1o_prev, d1e, d1o], axis=-1),    # even output rows
         jnp.concatenate([d1e, d1o, d1e_next], axis=-1)],   # odd  output rows
        axis=1).reshape(B * 2 * H, 3 * C1)                          # bf16
    d2 = bn_relu(mm(a2, w2_ref), s2_ref, t2_ref).astype(jnp.bfloat16)
    C2 = d2.shape[-1]
    d2 = d2.reshape(B, 2 * H, C2)
    d2e, d2o = d2[:, :H], d2[:, H:]

    # ---- dbl_3: conv k=3 s=2 as one im2col matmul (B*Lo, 3*C2) @ (3*C2, 96)
    ad = jnp.concatenate([d2e[:, :Lo], d2o[:, :Lo], d2e[:, 1:Lo + 1]],
                         axis=-1).reshape(B * Lo, 3 * C2)           # bf16
    d3 = bn_relu(mm(ad, wd_ref), sd_ref, td_ref)                    # (B*Lo, 96)

    # ---- channel concat via two lane-aligned stores; no full-slab reg concat.
    off = b3.shape[-1]                               # 384, multiple of 128
    o_ref[:, :, :off] = b3.reshape(B, Lo, off).astype(o_ref.dtype)
    n_tail_pad = C_pad - off - d3.shape[-1] - Cin
    tail_parts = [d3, pool.astype(jnp.float32)]
    if n_tail_pad:
        tail_parts.append(jnp.zeros((B * Lo, n_tail_pad), jnp.float32))
    tail = jnp.concatenate(tail_parts, axis=-1)      # (B*Lo, C_pad-384) = 128 wide
    o_ref[:, :, off:] = tail.reshape(B, Lo, C_pad - off).astype(o_ref.dtype)


# ----------------------------------------------------------------------------
# Wrapper: layout plumbing + single pallas_call.
# ----------------------------------------------------------------------------
def inception_b_forward(x_ncl, params, *, batch_block=None, out_dtype=None):
    """x_ncl: (N, Cin, L) like PyTorch.  Returns (N, 384 + 96 + Cin, Lo)."""
    N, Cin, L = x_ncl.shape
    assert L % 2 == 0 and L >= 4, "fused kernel assumes even L"
    H, Lo = L // 2, (L - 3) // 2 + 1
    C_out = 384 + 96 + Cin
    C_pad = ((C_out + 127) // 128) * 128           # lane-dense output slab
    out_dtype = out_dtype or x_ncl.dtype           # TODO(synk): bf16 slab halves writeback

    # Batch fold: B_blk elements per grid step -> every matmul has M = B_blk*Lo
    # (or B_blk*2H) rows, amortizing per-step pipeline overhead. Largest divisor
    # of N <= 8; re-derive the per-step VMEM budget (and set vmem_limit_bytes)
    # before raising the cap or L on v7x's smaller (64 MiB) VMEM.
    if batch_block is None:
        batch_block = max(b for b in range(1, min(N, 8) + 1) if N % b == 0)
    B_blk = batch_block
    assert N % B_blk == 0

    # Channels-last + space-to-depth (a free, contiguous reshape) + one bf16
    # cast: row r holds positions 2r and 2r+1, so every stride-2 window is a
    # contiguous lane slice and the HBM->VMEM DMA is half the f32 bytes.
    x = jnp.transpose(x_ncl, (0, 2, 1)).reshape(N, H, 2 * Cin).astype(jnp.bfloat16)

    def flat_bf16(w):   # (K, Cin, Cout) -> im2col weight (K*Cin, Cout) in bf16
        K, ci, co = w.shape
        return w.reshape(K * ci, co).astype(jnp.bfloat16)

    w3, s3, t3 = params["branch3x3"]
    w1, s1, t1 = params["dbl_1"]
    w2, s2, t2 = params["dbl_2"]
    wd, sd, td = params["dbl_3"]
    ws = [flat_bf16(w3), s3, t3, flat_bf16(w1), s1, t1,
          flat_bf16(w2), s2, t2, flat_bf16(wd), sd, td]

    def rep(a):   # whole-array block, replicated across the batch grid
        return pl.BlockSpec(a.shape, lambda n, _nd=a.ndim: (0,) * _nd)

    kernel = functools.partial(_inception_b_kernel,
                               Cin=Cin, H=H, Lo=Lo, C_pad=C_pad, B_blk=B_blk)

    out = pl.pallas_call(
        kernel,
        out_shape=jax.ShapeDtypeStruct((N, Lo, C_pad), out_dtype),
        grid=(N // B_blk,),
        in_specs=[pl.BlockSpec((B_blk, H, 2 * Cin), lambda n: (n, 0, 0))]
                 + [rep(a) for a in ws],
        out_specs=pl.BlockSpec((B_blk, Lo, C_pad), lambda n: (n, 0, 0)),
        compiler_params=pltpu.CompilerParams(
            dimension_semantics=("parallel",)),    # batch axis feeds both v7x TCs
    )(x, *ws)

    # TODO(synk): keep channels-last (N, Lo, C) and/or a bf16 slab if the
    # consumer allows it; the slice + transpose to NCL is only for PyTorch parity.
    return jnp.transpose(out[:, :, :C_out], (0, 2, 1))


# ----------------------------------------------------------------------------
# Parameter construction (deterministic, synthetic; BN folded to scale/shift).
# ----------------------------------------------------------------------------
def make_basic_conv1d_params(key, in_ch, out_ch, kernel_size, eps=1e-3):
    kw, kg, kb, km, kv = jax.random.split(key, 5)
    fan_in = in_ch * kernel_size
    w = jax.random.normal(kw, (kernel_size, in_ch, out_ch), jnp.float32) / jnp.sqrt(fan_in)
    gamma = jax.random.uniform(kg, (out_ch,), jnp.float32, 0.5, 1.5)
    beta = 0.1 * jax.random.normal(kb, (out_ch,), jnp.float32)
    mean = 0.1 * jax.random.normal(km, (out_ch,), jnp.float32)
    var = jax.random.uniform(kv, (out_ch,), jnp.float32, 0.5, 1.5)
    scale = gamma / jnp.sqrt(var + eps)
    bias = beta - mean * scale
    return w, scale.reshape(1, out_ch), bias.reshape(1, out_ch)


# ----------------------------------------------------------------------------
# Pure-JAX reference (same intentional bf16-input / f32-accumulate precision).
# ----------------------------------------------------------------------------
def _ref_basic_conv1d(x, w, scale, bias, stride, padding):
    if padding:
        x = jnp.pad(x, ((0, 0), (padding, padding), (0, 0)))
    K = w.shape[0]
    Lo = (x.shape[1] - K) // stride + 1
    acc = jnp.zeros((x.shape[0], Lo, w.shape[-1]), jnp.float32)
    for k in range(K):
        xs = x[:, k:k + stride * (Lo - 1) + 1:stride, :]
        acc = acc + jnp.einsum("nlc,cd->nld",
                               xs.astype(jnp.bfloat16), w[k].astype(jnp.bfloat16),
                               preferred_element_type=jnp.float32)
    return jnp.maximum(acc * scale + bias, 0.0)


def _ref_maxpool(x, K, stride):
    Lo = (x.shape[1] - K) // stride + 1
    out = x[:, 0:stride * (Lo - 1) + 1:stride, :]
    for k in range(1, K):
        out = jnp.maximum(out, x[:, k:k + stride * (Lo - 1) + 1:stride, :])
    return out


def _ref_forward(x_ncl, params):
    # Match the kernel's intentional precision choice: bf16 activations feed
    # the MXU (and the max-pool branch), f32 accumulation + BN/ReLU epilogue.
    x = jnp.transpose(x_ncl, (0, 2, 1)).astype(jnp.bfloat16).astype(jnp.float32)
    b3 = _ref_basic_conv1d(x, *params["branch3x3"], 2, 0)
    d = _ref_basic_conv1d(x, *params["dbl_1"], 1, 0)
    d = _ref_basic_conv1d(d, *params["dbl_2"], 1, 1)
    d = _ref_basic_conv1d(d, *params["dbl_3"], 2, 0)
    bp = _ref_maxpool(x, 3, 2)
    return jnp.transpose(jnp.concatenate([b3, d, bp], axis=-1), (0, 2, 1))


# ----------------------------------------------------------------------------
if __name__ == "__main__":
    key = jax.random.PRNGKey(0)
    N, Cin, L = 2, 16, 16   # small shapes: batch=2, in_channels=16, length=16

    kx, k1, k2, k3, k4 = jax.random.split(key, 5)
    x = jax.random.normal(kx, (N, Cin, L), jnp.float32)   # PyTorch NCL input

    params = {
        "branch3x3": make_basic_conv1d_params(k1, Cin, 384, 3),
        "dbl_1": make_basic_conv1d_params(k2, Cin, 64, 1),
        "dbl_2": make_basic_conv1d_params(k3, 64, 96, 3),
        "dbl_3": make_basic_conv1d_params(k4, 96, 96, 3),
    }

    out = jax.block_until_ready(inception_b_forward(x, params))
    ref = _ref_forward(x, params)

    Lo = (L - 3) // 2 + 1
    assert out.shape == (N, 384 + 96 + Cin, Lo), out.shape
    assert jnp.allclose(out, ref, rtol=1e-2, atol=1e-2), \
        float(jnp.max(jnp.abs(out - ref)))

    print("KERNEL_OK")
</pallas_src>

<mosaic_0001>
module attributes {stable_mosaic.version = 11 : i64} {
  func.func @_inception_b_kernel(%arg0: i32, %arg1: memref<2x8x32xbf16, #tpu.memory_space<vmem>>, %arg2: memref<48x384xbf16, #tpu.memory_space<vmem>>, %arg3: memref<1x384xf32, #tpu.memory_space<vmem>>, %arg4: memref<1x384xf32, #tpu.memory_space<vmem>>, %arg5: memref<16x64xbf16, #tpu.memory_space<vmem>>, %arg6: memref<1x64xf32, #tpu.memory_space<vmem>>, %arg7: memref<1x64xf32, #tpu.memory_space<vmem>>, %arg8: memref<192x96xbf16, #tpu.memory_space<vmem>>, %arg9: memref<1x96xf32, #tpu.memory_space<vmem>>, %arg10: memref<1x96xf32, #tpu.memory_space<vmem>>, %arg11: memref<288x96xbf16, #tpu.memory_space<vmem>>, %arg12: memref<1x96xf32, #tpu.memory_space<vmem>>, %arg13: memref<1x96xf32, #tpu.memory_space<vmem>>, %arg14: memref<2x7x512xf32, #tpu.memory_space<vmem>>) attributes {dimension_semantics = [#tpu.dimension_semantics<parallel>], iteration_bounds = array<i64: 1>, scalar_prefetch = 0 : i64, scratch_operands = 0 : i64, tpu.core_type = #tpu.core_type<tc>, window_params = [{transform_indices = @transform_0, window_bounds = array<i64: 2, 8, 32>}, {pipeline_mode = #tpu.pipeline_mode<synchronous>, transform_indices = @transform_1, window_bounds = array<i64: 48, 384>}, {pipeline_mode = #tpu.pipeline_mode<synchronous>, transform_indices = @transform_2, window_bounds = array<i64: 1, 384>}, {pipeline_mode = #tpu.pipeline_mode<synchronous>, transform_indices = @transform_3, window_bounds = array<i64: 1, 384>}, {pipeline_mode = #tpu.pipeline_mode<synchronous>, transform_indices = @transform_4, window_bounds = array<i64: 16, 64>}, {pipeline_mode = #tpu.pipeline_mode<synchronous>, transform_indices = @transform_5, window_bounds = array<i64: 1, 64>}, {pipeline_mode = #tpu.pipeline_mode<synchronous>, transform_indices = @transform_6, window_bounds = array<i64: 1, 64>}, {pipeline_mode = #tpu.pipeline_mode<synchronous>, transform_indices = @transform_7, window_bounds = array<i64: 192, 96>}, {pipeline_mode = #tpu.pipeline_mode<synchronous>, transform_indices = @transform_8, window_bounds = array<i64: 1, 96>}, {pipeline_mode = #tpu.pipeline_mode<synchronous>, transform_indices = @transform_9, window_bounds = array<i64: 1, 96>}, {pipeline_mode = #tpu.pipeline_mode<synchronous>, transform_indices = @transform_10, window_bounds = array<i64: 288, 96>}, {pipeline_mode = #tpu.pipeline_mode<synchronous>, transform_indices = @transform_11, window_bounds = array<i64: 1, 96>}, {pipeline_mode = #tpu.pipeline_mode<synchronous>, transform_indices = @transform_12, window_bounds = array<i64: 1, 96>}, {transform_indices = @transform_13, window_bounds = array<i64: 2, 7, 512>}]} {
    %c0 = arith.constant 0 : index
    %c0_0 = arith.constant 0 : index
    %c0_1 = arith.constant 0 : index
    %0 = vector.load %arg1[%c0, %c0_0, %c0_1] : memref<2x8x32xbf16, #tpu.memory_space<vmem>>, vector<2x8x32xbf16>
    %1 = vector.extract_strided_slice %0 {offsets = [0, 0, 0], sizes = [2, 8, 16], strides = [1, 1, 1]} : vector<2x8x32xbf16> to vector<2x8x16xbf16>
    %2 = vector.extract_strided_slice %0 {offsets = [0, 0, 16], sizes = [2, 8, 16], strides = [1, 1, 1]} : vector<2x8x32xbf16> to vector<2x8x16xbf16>
    %3 = vector.extract_strided_slice %1 {offsets = [0, 0, 0], sizes = [2, 7, 16], strides = [1, 1, 1]} : vector<2x8x16xbf16> to vector<2x7x16xbf16>
    %4 = vector.extract_strided_slice %2 {offsets = [0, 0, 0], sizes = [2, 7, 16], strides = [1, 1, 1]} : vector<2x8x16xbf16> to vector<2x7x16xbf16>
    %5 = vector.extract_strided_slice %1 {offsets = [0, 1, 0], sizes = [2, 7, 16], strides = [1, 1, 1]} : vector<2x8x16xbf16> to vector<2x7x16xbf16>
    %6 = tpu.concatenate %3, %4, %5 in 2 : vector<2x7x16xbf16>, vector<2x7x16xbf16>, vector<2x7x16xbf16> -> vector<2x7x48xbf16>
    %7 = vector.shape_cast %6 : vector<2x7x48xbf16> to vector<14x48xbf16>
    %c0_2 = arith.constant 0 : index
    %c0_3 = arith.constant 0 : index
    %8 = vector.load %arg2[%c0_2, %c0_3] : memref<48x384xbf16, #tpu.memory_space<vmem>>, vector<48x384xbf16>
    %cst = arith.constant dense<0.000000e+00> : vector<14x384xf32>
    %9 = tpu.matmul %7, %8, %cst {dimension_numbers = #tpu.dot_dimension_numbers<[1], [0], [0], [1], [0, 0, 1, 1], [], []>} : vector<14x48xbf16>, vector<48x384xbf16>, vector<14x384xf32> -> vector<14x384xf32>
    %c0_4 = arith.constant 0 : index
    %c0_5 = arith.constant 0 : index
    %10 = vector.load %arg3[%c0_4, %c0_5] : memref<1x384xf32, #tpu.memory_space<vmem>>, vector<1x384xf32>
    %11 = vector.broadcast %10 : vector<1x384xf32> to vector<14x384xf32>
    %12 = arith.mulf %9, %11 : vector<14x384xf32>
    %c0_6 = arith.constant 0 : index
    %c0_7 = arith.constant 0 : index
    %13 = vector.load %arg4[%c0_6, %c0_7] : memref<1x384xf32, #tpu.memory_space<vmem>>, vector<1x384xf32>
    %14 = vector.broadcast %13 : vector<1x384xf32> to vector<14x384xf32>
    %15 = arith.addf %12, %14 : vector<14x384xf32>
    %cst_8 = arith.constant 0.000000e+00 : f32
    %16 = vector.broadcast %cst_8 : f32 to vector<14x384xf32>
    %17 = arith.maximumf %15, %16 : vector<14x384xf32>
    %18 = vector.extract_strided_slice %1 {offsets = [0, 0, 0], sizes = [2, 7, 16], strides = [1, 1, 1]} : vector<2x8x16xbf16> to vector<2x7x16xbf16>
    %19 = vector.extract_strided_slice %2 {offsets = [0, 0, 0], sizes = [2, 7, 16], strides = [1, 1, 1]} : vector<2x8x16xbf16> to vector<2x7x16xbf16>
    %20 = arith.maximumf %18, %19 : vector<2x7x16xbf16>
    %21 = vector.extract_strided_slice %1 {offsets = [0, 1, 0], sizes = [2, 7, 16], strides = [1, 1, 1]} : vector<2x8x16xbf16> to vector<2x7x16xbf16>
    %22 = arith.maximumf %20, %21 : vector<2x7x16xbf16>
    %23 = vector.shape_cast %22 : vector<2x7x16xbf16> to vector<14x16xbf16>
    %24 = tpu.concatenate %1, %2 in 1 : vector<2x8x16xbf16>, vector<2x8x16xbf16> -> vector<2x16x16xbf16>
    %25 = vector.shape_cast %24 : vector<2x16x16xbf16> to vector<32x16xbf16>
    %c0_9 = arith.constant 0 : index
    %c0_10 = arith.constant 0 : index
    %26 = vector.load %arg5[%c0_9, %c0_10] : memref<16x64xbf16, #tpu.memory_space<vmem>>, vector<16x64xbf16>
    %cst_11 = arith.constant dense<0.000000e+00> : vector<32x64xf32>
    %27 = tpu.matmul %25, %26, %cst_11 {dimension_numbers = #tpu.dot_dimension_numbers<[1], [0], [0], [1], [0, 0, 1, 1], [], []>} : vector<32x16xbf16>, vector<16x64xbf16>, vector<32x64xf32> -> vector<32x64xf32>
    %c0_12 = arith.constant 0 : index
    %c0_13 = arith.constant 0 : index
    %28 = vector.load %arg6[%c0_12, %c0_13] : memref<1x64xf32, #tpu.memory_space<vmem>>, vector<1x64xf32>
    %29 = vector.broadcast %28 : vector<1x64xf32> to vector<32x64xf32>
    %30 = arith.mulf %27, %29 : vector<32x64xf32>
    %c0_14 = arith.constant 0 : index
    %c0_15 = arith.constant 0 : index
    %31 = vector.load %arg7[%c0_14, %c0_15] : memref<1x64xf32, #tpu.memory_space<vmem>>, vector<1x64xf32>
    %32 = vector.broadcast %31 : vector<1x64xf32> to vector<32x64xf32>
    %33 = arith.addf %30, %32 : vector<32x64xf32>
    %cst_16 = arith.constant 0.000000e+00 : f32
    %34 = vector.broadcast %cst_16 : f32 to vector<32x64xf32>
    %35 = arith.maximumf %33, %34 : vector<32x64xf32>
    %36 = arith.truncf %35 : vector<32x64xf32> to vector<32x64xbf16>
    %37 = vector.shape_cast %36 : vector<32x64xbf16> to vector<2x16x64xbf16>
    %38 = vector.extract_strided_slice %37 {offsets = [0, 0, 0], sizes = [2, 8, 64], strides = [1, 1, 1]} : vector<2x16x64xbf16> to vector<2x8x64xbf16>
    %39 = vector.extract_strided_slice %37 {offsets = [0, 8, 0], sizes = [2, 8, 64], strides = [1, 1, 1]} : vector<2x16x64xbf16> to vector<2x8x64xbf16>
    %cst_17 = arith.constant 0.000000e+00 : bf16
    %40 = vector.broadcast %cst_17 : bf16 to vector<2x1x64xbf16>
    %41 = vector.extract_strided_slice %39 {offsets = [0, 0, 0], sizes = [2, 7, 64], strides = [1, 1, 1]} : vector<2x8x64xbf16> to vector<2x7x64xbf16>
    %42 = tpu.concatenate %40, %41 in 1 : vector<2x1x64xbf16>, vector<2x7x64xbf16> -> vector<2x8x64xbf16>
    %43 = vector.extract_strided_slice %38 {offsets = [0, 1, 0], sizes = [2, 7, 64], strides = [1, 1, 1]} : vector<2x8x64xbf16> to vector<2x7x64xbf16>
    %44 = tpu.concatenate %43, %40 in 1 : vector<2x7x64xbf16>, vector<2x1x64xbf16> -> vector<2x8x64xbf16>
    %45 = tpu.concatenate %42, %38, %39 in 2 : vector<2x8x64xbf16>, vector<2x8x64xbf16>, vector<2x8x64xbf16> -> vector<2x8x192xbf16>
    %46 = tpu.concatenate %38, %39, %44 in 2 : vector<2x8x64xbf16>, vector<2x8x64xbf16>, vector<2x8x64xbf16> -> vector<2x8x192xbf16>
    %47 = tpu.concatenate %45, %46 in 1 : vector<2x8x192xbf16>, vector<2x8x192xbf16> -> vector<2x16x192xbf16>
    %48 = vector.shape_cast %47 : vector<2x16x192xbf16> to vector<32x192xbf16>
    %c0_18 = arith.constant 0 : index
    %c0_19 = arith.constant 0 : index
    %49 = vector.load %arg8[%c0_18, %c0_19] : memref<192x96xbf16, #tpu.memory_space<vmem>>, vector<192x96xbf16>
    %cst_20 = arith.constant dense<0.000000e+00> : vector<32x96xf32>
    %50 = tpu.matmul %48, %49, %cst_20 {dimension_numbers = #tpu.dot_dimension_numbers<[1], [0], [0], [1], [0, 0, 1, 1], [], []>} : vector<32x192xbf16>, vector<192x96xbf16>, vector<32x96xf32> -> vector<32x96xf32>
    %c0_21 = arith.constant 0 : index
    %c0_22 = arith.constant 0 : index
    %51 = vector.load %arg9[%c0_21, %c0_22] : memref<1x96xf32, #tpu.memory_space<vmem>>, vector<1x96xf32>
    %52 = vector.broadcast %51 : vector<1x96xf32> to vector<32x96xf32>
    %53 = arith.mulf %50, %52 : vector<32x96xf32>
    %c0_23 = arith.constant 0 : index
    %c0_24 = arith.constant 0 : index
    %54 = vector.load %arg10[%c0_23, %c0_24] : memref<1x96xf32, #tpu.memory_space<vmem>>, vector<1x96xf32>
    %55 = vector.broadcast %54 : vector<1x96xf32> to vector<32x96xf32>
    %56 = arith.addf %53, %55 : vector<32x96xf32>
    %cst_25 = arith.constant 0.000000e+00 : f32
    %57 = vector.broadcast %cst_25 : f32 to vector<32x96xf32>
    %58 = arith.maximumf %56, %57 : vector<32x96xf32>
    %59 = arith.truncf %58 : vector<32x96xf32> to vector<32x96xbf16>
    %60 = vector.shape_cast %59 : vector<32x96xbf16> to vector<2x16x96xbf16>
    %61 = vector.extract_strided_slice %60 {offsets = [0, 0, 0], sizes = [2, 8, 96], strides = [1, 1, 1]} : vector<2x16x96xbf16> to vector<2x8x96xbf16>
    %62 = vector.extract_strided_slice %60 {offsets = [0, 8, 0], sizes = [2, 8, 96], strides = [1, 1, 1]} : vector<2x16x96xbf16> to vector<2x8x96xbf16>
    %63 = vector.extract_strided_slice %61 {offsets = [0, 0, 0], sizes = [2, 7, 96], strides = [1, 1, 1]} : vector<2x8x96xbf16> to vector<2x7x96xbf16>
    %64 = vector.extract_strided_slice %62 {offsets = [0, 0, 0], sizes = [2, 7, 96], strides = [1, 1, 1]} : vector<2x8x96xbf16> to vector<2x7x96xbf16>
    %65 = vector.extract_strided_slice %61 {offsets = [0, 1, 0], sizes = [2, 7, 96], strides = [1, 1, 1]} : vector<2x8x96xbf16> to vector<2x7x96xbf16>
    %66 = tpu.concatenate %63, %64, %65 in 2 : vector<2x7x96xbf16>, vector<2x7x96xbf16>, vector<2x7x96xbf16> -> vector<2x7x288xbf16>
    %67 = vector.shape_cast %66 : vector<2x7x288xbf16> to vector<14x288xbf16>
    %c0_26 = arith.constant 0 : index
    %c0_27 = arith.constant 0 : index
    %68 = vector.load %arg11[%c0_26, %c0_27] : memref<288x96xbf16, #tpu.memory_space<vmem>>, vector<288x96xbf16>
    %cst_28 = arith.constant dense<0.000000e+00> : vector<14x96xf32>
    %69 = tpu.matmul %67, %68, %cst_28 {dimension_numbers = #tpu.dot_dimension_numbers<[1], [0], [0], [1], [0, 0, 1, 1], [], []>} : vector<14x288xbf16>, vector<288x96xbf16>, vector<14x96xf32> -> vector<14x96xf32>
    %c0_29 = arith.constant 0 : index
    %c0_30 = arith.constant 0 : index
    %70 = vector.load %arg12[%c0_29, %c0_30] : memref<1x96xf32, #tpu.memory_space<vmem>>, vector<1x96xf32>
    %71 = vector.broadcast %70 : vector<1x96xf32> to vector<14x96xf32>
    %72 = arith.mulf %69, %71 : vector<14x96xf32>
    %c0_31 = arith.constant 0 : index
    %c0_32 = arith.constant 0 : index
    %73 = vector.load %arg13[%c0_31, %c0_32] : memref<1x96xf32, #tpu.memory_space<vmem>>, vector<1x96xf32>
    %74 = vector.broadcast %73 : vector<1x96xf32> to vector<14x96xf32>
    %75 = arith.addf %72, %74 : vector<14x96xf32>
    %cst_33 = arith.constant 0.000000e+00 : f32
    %76 = vector.broadcast %cst_33 : f32 to vector<14x96xf32>
    %77 = arith.maximumf %75, %76 : vector<14x96xf32>
    %78 = vector.shape_cast %17 : vector<14x384xf32> to vector<2x7x384xf32>
    %c0_34 = arith.constant 0 : index
    %c0_35 = arith.constant 0 : index
    %c0_36 = arith.constant 0 : index
    %79 = vector.load %arg14[%c0_34, %c0_35, %c0_36] : memref<2x7x512xf32, #tpu.memory_space<vmem>>, vector<2x7x384xf32>
    tpu.vector_store %arg14[%c0_34, %c0_35, %c0_36], %78 {strides = array<i32>} : memref<2x7x512xf32, #tpu.memory_space<vmem>>, vector<2x7x384xf32>,
    %80 = arith.extf %23 : vector<14x16xbf16> to vector<14x16xf32>
    %cst_37 = arith.constant 0.000000e+00 : f32
    %81 = vector.broadcast %cst_37 : f32 to vector<14x16xf32>
    %82 = tpu.concatenate %77, %80, %81 in 1 : vector<14x96xf32>, vector<14x16xf32>, vector<14x16xf32> -> vector<14x128xf32>
    %83 = vector.shape_cast %82 : vector<14x128xf32> to vector<2x7x128xf32>
    %c0_38 = arith.constant 0 : index
    %c0_39 = arith.constant 0 : index
    %c384 = arith.constant 384 : index
    %84 = vector.load %arg14[%c0_38, %c0_39, %c384] : memref<2x7x512xf32, #tpu.memory_space<vmem>>, vector<2x7x128xf32>
    tpu.vector_store %arg14[%c0_38, %c0_39, %c384], %83 {strides = array<i32>} : memref<2x7x512xf32, #tpu.memory_space<vmem>>, vector<2x7x128xf32>,
    return
  }
  func.func @transform_0(%arg0: i32) -> (i32, i32, i32) {
    %c0_i32 = arith.constant 0 : i32
    %c0_i32_0 = arith.constant 0 : i32
    %c0_i32_1 = arith.constant 0 : i32
    return %arg0, %c0_i32, %c0_i32_0 : i32, i32, i32
  }
  func.func @transform_1(%arg0: i32) -> (i32, i32) {
    %c0_i32 = arith.constant 0 : i32
    %c0_i32_0 = arith.constant 0 : i32
    %c0_i32_1 = arith.constant 0 : i32
    return %c0_i32, %c0_i32_0 : i32, i32
  }
  func.func @transform_2(%arg0: i32) -> (i32, i32) {
    %c0_i32 = arith.constant 0 : i32
    %c0_i32_0 = arith.constant 0 : i32
    %c0_i32_1 = arith.constant 0 : i32
    return %c0_i32, %c0_i32_0 : i32, i32
  }
  func.func @transform_3(%arg0: i32) -> (i32, i32) {
    %c0_i32 = arith.constant 0 : i32
    %c0_i32_0 = arith.constant 0 : i32
    %c0_i32_1 = arith.constant 0 : i32
    return %c0_i32, %c0_i32_0 : i32, i32
  }
  func.func @transform_4(%arg0: i32) -> (i32, i32) {
    %c0_i32 = arith.constant 0 : i32
    %c0_i32_0 = arith.constant 0 : i32
    %c0_i32_1 = arith.constant 0 : i32
    return %c0_i32, %c0_i32_0 : i32, i32
  }
  func.func @transform_5(%arg0: i32) -> (i32, i32) {
    %c0_i32 = arith.constant 0 : i32
    %c0_i32_0 = arith.constant 0 : i32
    %c0_i32_1 = arith.constant 0 : i32
    return %c0_i32, %c0_i32_0 : i32, i32
  }
  func.func @transform_6(%arg0: i32) -> (i32, i32) {
    %c0_i32 = arith.constant 0 : i32
    %c0_i32_0 = arith.constant 0 : i32
    %c0_i32_1 = arith.constant 0 : i32
    return %c0_i32, %c0_i32_0 : i32, i32
  }
  func.func @transform_7(%arg0: i32) -> (i32, i32) {
    %c0_i32 = arith.constant 0 : i32
    %c0_i32_0 = arith.constant 0 : i32
    %c0_i32_1 = arith.constant 0 : i32
    return %c0_i32, %c0_i32_0 : i32, i32
  }
  func.func @transform_8(%arg0: i32) -> (i32, i32) {
    %c0_i32 = arith.constant 0 : i32
    %c0_i32_0 = arith.constant 0 : i32
    %c0_i32_1 = arith.constant 0 : i32
    return %c0_i32, %c0_i32_0 : i32, i32
  }
  func.func @transform_9(%arg0: i32) -> (i32, i32) {
    %c0_i32 = arith.constant 0 : i32
    %c0_i32_0 = arith.constant 0 : i32
    %c0_i32_1 = arith.constant 0 : i32
    return %c0_i32, %c0_i32_0 : i32, i32
  }
  func.func @transform_10(%arg0: i32) -> (i32, i32) {
    %c0_i32 = arith.constant 0 : i32
    %c0_i32_0 = arith.constant 0 : i32
    %c0_i32_1 = arith.constant 0 : i32
    return %c0_i32, %c0_i32_0 : i32, i32
  }
  func.func @transform_11(%arg0: i32) -> (i32, i32) {
    %c0_i32 = arith.constant 0 : i32
    %c0_i32_0 = arith.constant 0 : i32
    %c0_i32_1 = arith.constant 0 : i32
    return %c0_i32, %c0_i32_0 : i32, i32
  }
  func.func @transform_12(%arg0: i32) -> (i32, i32) {
    %c0_i32 = arith.constant 0 : i32
    %c0_i32_0 = arith.constant 0 : i32
    %c0_i32_1 = arith.constant 0 : i32
    return %c0_i32, %c0_i32_0 : i32, i32
  }
  func.func @transform_13(%arg0: i32) -> (i32, i32, i32) {
    %c0_i32 = arith.constant 0 : i32
    %c0_i32_0 = arith.constant 0 : i32
    %c0_i32_1 = arith.constant 0 : i32
    return %arg0, %c0_i32, %c0_i32_0 : i32, i32, i32
  }
}

</mosaic_0001>

<llo_original>
// kernel: tpu_custom_call.1
$region0: #{tpu_custom_call.1}
  #allocation0 [shape = 'u32[]', space=smem, size = 0x4, offset = 0x4, fixed_abs, tag = 'smem constant byte address 0x4 - core index']
  #allocation1 [shape = 'u32[72,128]{1,0:T(1,128)}', space=vmem, size = 0x9000, scoped, tag = 'internal scratch']
  %s0 = inlined_call_operand.hbm [shape: bf16[2,8,32], index: 0, kind: input, shape index: {}]
  %s1 = inlined_call_operand.hbm [shape: bf16[48,384], index: 1, kind: input, shape index: {}]
  %s2 = inlined_call_operand.hbm [shape: f32[1,384], index: 2, kind: input, shape index: {}]
  %s3 = inlined_call_operand.hbm [shape: f32[1,384], index: 3, kind: input, shape index: {}]
  %s4 = inlined_call_operand.hbm [shape: bf16[16,64], index: 4, kind: input, shape index: {}]
  %s5 = inlined_call_operand.vmem [shape: f32[1,64], index: 5, kind: input, shape index: {}]
  %s6 = inlined_call_operand.vmem [shape: f32[1,64], index: 6, kind: input, shape index: {}]
  %s7 = inlined_call_operand.hbm [shape: bf16[192,96], index: 7, kind: input, shape index: {}]
  %s8 = inlined_call_operand.vmem [shape: f32[1,96], index: 8, kind: input, shape index: {}]
  %s9 = inlined_call_operand.vmem [shape: f32[1,96], index: 9, kind: input, shape index: {}]
  %s10 = inlined_call_operand.hbm [shape: bf16[288,96], index: 10, kind: input, shape index: {}]
  %s11 = inlined_call_operand.vmem [shape: f32[1,96], index: 11, kind: input, shape index: {}]
  %s12 = inlined_call_operand.vmem [shape: f32[1,96], index: 12, kind: input, shape index: {}]
  %s13 = inlined_call_operand.vmem [shape: f32[2,7,512], index: 13, kind: output, shape index: {}]
  %s14 = sld [smem:[#allocation0]]
  $region90: #{tpu_custom_call.1} parent=0
    _
  %s16 = ssub.s32 1, %s14
  %s17 = scalar_select 0, %s16, %s14
  $region1: #{tpu_custom_call.1} parent=0
    #allocation2 [shape = 'u8[4096]{0}', space=vmem, size = 0x1000, scoped, tag = 'input window, operand 0, single buffered']
    #allocation3 [shape = 's32[1]{0}', space=sflag, size = 0x4, scoped, tag = 'scoped memory for tpu_custom_call.1']
    #allocation4 [shape = 'u8[36864]{0}', space=vmem, size = 0x9000, scoped, tag = 'input window, operand 1, single buffered']
    #allocation5 [shape = 's32[1]{0}', space=sflag, size = 0x4, scoped, tag = 'scoped memory for tpu_custom_call.1']
    #allocation6 [shape = 'u8[1536]{0}', space=vmem, size = 0x800, scoped, tag = 'input window, operand 2, single buffered']
    #allocation7 [shape = 'u8[1536]{0}', space=vmem, size = 0x800, scoped, tag = 'input window, operand 3, single buffered']
    #allocation8 [shape = 's32[1]{0}', space=sflag, size = 0x4, scoped, tag = 'scoped memory for tpu_custom_call.1']
    #allocation9 [shape = 'u8[4096]{0}', space=vmem, size = 0x1000, scoped, tag = 'input window, operand 4, single buffered']
    #allocation10 [shape = 'u8[49152]{0}', space=vmem, size = 0xc000, scoped, tag = 'input window, operand 7, single buffered']
    #allocation11 [shape = 's32[1]{0}', space=sflag, size = 0x4, scoped, tag = 'scoped memory for tpu_custom_call.1']
    #allocation12 [shape = 'u8[73728]{0}', space=vmem, size = 0x12000, scoped, tag = 'input window, operand 10, single buffered']
    %18 = vsyncpa [#allocation3], 0
    %19 = vsyncpa [#allocation5], 0
    %20 = vsyncpa [#allocation8], 0
    %21 = vsyncpa [#allocation11], 0
    // Predicated region
    $region2: #{tpu_custom_call.1} parent=1 // pred_check
      _
    $region3: #{tpu_custom_call.1} parent=1 // pred_check_branch
      %23 = sbr.rel (0) target = $region5
    $region4: #{tpu_custom_call.1} parent=1 // pred_region
      %25 = vsyncadd [#allocation3], 0
      %s26 = sshll.u32 %s0, 4
      %s27 = int_to_ptr.hbm [resolvable:$true] %s26
      %s28 = sshll.u32 [#allocation2], 4
      %s29 = int_to_ptr.vmem [resolvable:$true] %s28
      %34 = dma.hbm_to_vmem [thread:$0]  %s27, 128, %s29, [#allocation3], 64, 64, 4
    $region5: #{tpu_custom_call.1} parent=1 // pred_fallthru
      _
    // Predicated region
    $region6: #{tpu_custom_call.1} parent=1 // pred_check
      _
    $region7: #{tpu_custom_call.1} parent=1 // pred_check_branch
      %36 = sbr.rel (0) target = $region9
    $region8: #{tpu_custom_call.1} parent=1 // pred_region
      %38 = vsyncadd [#allocation5], 0
      %s39 = sshll.u32 %s1, 4
      %s40 = int_to_ptr.hbm [resolvable:$true] %s39
      %s41 = sshll.u32 [#allocation4], 4
      %s42 = int_to_ptr.vmem [resolvable:$true] %s41
      %47 = dma.hbm_to_vmem [thread:$0]  %s40, 1152, %s42, [#allocation5], 192, 192, 12
    $region9: #{tpu_custom_call.1} parent=1 // pred_fallthru
      _
    // Predicated region
    $region10: #{tpu_custom_call.1} parent=1 // pred_check
      _
    $region11: #{tpu_custom_call.1} parent=1 // pred_check_branch
      %49 = sbr.rel (0) target = $region13
    $region12: #{tpu_custom_call.1} parent=1 // pred_region
      %51 = vsyncadd [#allocation5], 0
      %s53 = sshll.u32 %s2, 4
      %s54 = int_to_ptr.hbm [resolvable:$true] %s53
      %s55 = sshll.u32 [#allocation6], 4
      %s56 = int_to_ptr.vmem [resolvable:$true] %s55
      %58 = dma.hbm_to_vmem [thread:$0]  %s54, 48, %s56, [#allocation5]
    $region13: #{tpu_custom_call.1} parent=1 // pred_fallthru
      _
    // Predicated region
    $region14: #{tpu_custom_call.1} parent=1 // pred_check
      _
    $region15: #{tpu_custom_call.1} parent=1 // pred_check_branch
      %60 = sbr.rel (0) target = $region17
    $region16: #{tpu_custom_call.1} parent=1 // pred_region
      %62 = vsyncadd [#allocation8], 0
      %s64 = sshll.u32 %s3, 4
      %s65 = int_to_ptr.hbm [resolvable:$true] %s64
      %s66 = sshll.u32 [#allocation7], 4
      %s67 = int_to_ptr.vmem [resolvable:$true] %s66
      %69 = dma.hbm_to_vmem [thread:$0]  %s65, 48, %s67, [#allocation8]
    $region17: #{tpu_custom_call.1} parent=1 // pred_fallthru
      _
    // Predicated region
    $region18: #{tpu_custom_call.1} parent=1 // pred_check
      _
    $region19: #{tpu_custom_call.1} parent=1 // pred_check_branch
      %71 = sbr.rel (0) target = $region21
    $region20: #{tpu_custom_call.1} parent=1 // pred_region
      %73 = vsyncadd [#allocation8], 0
      %s74 = sshll.u32 %s4, 4
      %s75 = int_to_ptr.hbm [resolvable:$true] %s74
      %s76 = sshll.u32 [#allocation9], 4
      %s77 = int_to_ptr.vmem [resolvable:$true] %s76
      %82 = dma.hbm_to_vmem [thread:$0]  %s75, 128, %s77, [#allocation8], 64, 64, 4
    $region21: #{tpu_custom_call.1} parent=1 // pred_fallthru
      _
    // Predicated region
    $region22: #{tpu_custom_call.1} parent=1 // pred_check
      _
    $region23: #{tpu_custom_call.1} parent=1 // pred_check_branch
      %84 = sbr.rel (0) target = $region25
    $region24: #{tpu_custom_call.1} parent=1 // pred_region
      _
    $region25: #{tpu_custom_call.1} parent=1 // pred_fallthru
      _
    // Predicated region
    $region26: #{tpu_custom_call.1} parent=1 // pred_check
      _
    $region27: #{tpu_custom_call.1} parent=1 // pred_check_branch
      %86 = sbr.rel (0) target = $region29
    $region28: #{tpu_custom_call.1} parent=1 // pred_region
      _
    $region29: #{tpu_custom_call.1} parent=1 // pred_fallthru
      _
    // Predicated region
    $region30: #{tpu_custom_call.1} parent=1 // pred_check
      _
    $region31: #{tpu_custom_call.1} parent=1 // pred_check_branch
      %88 = sbr.rel (0) target = $region33
    $region32: #{tpu_custom_call.1} parent=1 // pred_region
      %90 = vsyncadd [#allocation11], 0
      %s91 = sshll.u32 %s7, 4
      %s92 = int_to_ptr.hbm [resolvable:$true] %s91
      %s93 = sshll.u32 [#allocation10], 4
      %s94 = int_to_ptr.vmem [resolvable:$true] %s93
      %99 = dma.hbm_to_vmem [thread:$0]  %s92, 1536, %s94, [#allocation11], 64, 64, 4
    $region33: #{tpu_custom_call.1} parent=1 // pred_fallthru
      _
    // Predicated region
    $region34: #{tpu_custom_call.1} parent=1 // pred_check
      _
    $region35: #{tpu_custom_call.1} parent=1 // pred_check_branch
      %101 = sbr.rel (0) target = $region37
    $region36: #{tpu_custom_call.1} parent=1 // pred_region
      _
    $region37: #{tpu_custom_call.1} parent=1 // pred_fallthru
      _
    // Predicated region
    $region38: #{tpu_custom_call.1} parent=1 // pred_check
      _
    $region39: #{tpu_custom_call.1} parent=1 // pred_check_branch
      %103 = sbr.rel (0) target = $region41
    $region40: #{tpu_custom_call.1} parent=1 // pred_region
      _
    $region41: #{tpu_custom_call.1} parent=1 // pred_fallthru
      _
    // Predicated region
    $region42: #{tpu_custom_call.1} parent=1 // pred_check
      _
    $region43: #{tpu_custom_call.1} parent=1 // pred_check_branch
      %105 = sbr.rel (0) target = $region45
    $region44: #{tpu_custom_call.1} parent=1 // pred_region
      %107 = vsyncadd [#allocation11], 0
      %s108 = sshll.u32 %s10, 4
      %s109 = int_to_ptr.hbm [resolvable:$true] %s108
      %s110 = sshll.u32 [#allocation12], 4
      %s111 = int_to_ptr.vmem [resolvable:$true] %s110
      %116 = dma.hbm_to_vmem [thread:$0]  %s109, 2304, %s111, [#allocation11], 64, 64, 4
    $region45: #{tpu_custom_call.1} parent=1 // pred_fallthru
      _
    // Predicated region
    $region46: #{tpu_custom_call.1} parent=1 // pred_check
      _
    $region47: #{tpu_custom_call.1} parent=1 // pred_check_branch
      %118 = sbr.rel (0) target = $region49
    $region48: #{tpu_custom_call.1} parent=1 // pred_region
      _
    $region49: #{tpu_custom_call.1} parent=1 // pred_fallthru
      _
    // Predicated region
    $region50: #{tpu_custom_call.1} parent=1 // pred_check
      _
    $region51: #{tpu_custom_call.1} parent=1 // pred_check_branch
      %120 = sbr.rel (0) target = $region53
    $region52: #{tpu_custom_call.1} parent=1 // pred_region
      _
    $region53: #{tpu_custom_call.1} parent=1 // pred_fallthru
      _
    // Predicated region
    $region54: #{tpu_custom_call.1} parent=1 // pred_check
      _
    $region55: #{tpu_custom_call.1} parent=1 // pred_check_branch
      %122 = sbr.rel (0) target = $region57
    $region56: #{tpu_custom_call.1} parent=1 // pred_region
      %124 = dma.done [#allocation3], 128
    $region57: #{tpu_custom_call.1} parent=1 // pred_fallthru
      _
    // Predicated region
    $region58: #{tpu_custom_call.1} parent=1 // pred_check
      _
    $region59: #{tpu_custom_call.1} parent=1 // pred_check_branch
      %126 = sbr.rel (0) target = $region61
    $region60: #{tpu_custom_call.1} parent=1 // pred_region
      %128 = dma.done [#allocation5], 1152
    $region61: #{tpu_custom_call.1} parent=1 // pred_fallthru
      _
    // Predicated region
    $region62: #{tpu_custom_call.1} parent=1 // pred_check
      _
    $region63: #{tpu_custom_call.1} parent=1 // pred_check_branch
      %130 = sbr.rel (0) target = $region65
    $region64: #{tpu_custom_call.1} parent=1 // pred_region
      %132 = dma.done [#allocation5], 48
    $region65: #{tpu_custom_call.1} parent=1 // pred_fallthru
      _
    // Predicated region
    $region66: #{tpu_custom_call.1} parent=1 // pred_check
      _
    $region67: #{tpu_custom_call.1} parent=1 // pred_check_branch
      %134 = sbr.rel (0) target = $region69
    $region68: #{tpu_custom_call.1} parent=1 // pred_region
      %136 = dma.done [#allocation8], 48
    $region69: #{tpu_custom_call.1} parent=1 // pred_fallthru
      _
    // Predicated region
    $region70: #{tpu_custom_call.1} parent=1 // pred_check
      _
    $region71: #{tpu_custom_call.1} parent=1 // pred_check_branch
      %138 = sbr.rel (0) target = $region73
    $region72: #{tpu_custom_call.1} parent=1 // pred_region
      %140 = dma.done [#allocation8], 128
    $region73: #{tpu_custom_call.1} parent=1 // pred_fallthru
      _
    // Predicated region
    $region74: #{tpu_custom_call.1} parent=1 // pred_check
      _
    $region75: #{tpu_custom_call.1} parent=1 // pred_check_branch
      %142 = sbr.rel (0) target = $region77
    $region76: #{tpu_custom_call.1} parent=1 // pred_region
      %144 = dma.done [#allocation11], 1536
    $region77: #{tpu_custom_call.1} parent=1 // pred_fallthru
      _
    // Predicated region
    $region78: #{tpu_custom_call.1} parent=1 // pred_check
      _
    $region79: #{tpu_custom_call.1} parent=1 // pred_check_branch
      %146 = sbr.rel (0) target = $region81
    $region80: #{tpu_custom_call.1} parent=1 // pred_region
      %148 = dma.done [#allocation11], 2304
    $region81: #{tpu_custom_call.1} parent=1 // pred_fallthru
      _
    %v150 = vld [vmem:[#allocation2] sm:$0xf]
    %v151 = vld [vmem:[#allocation2 + $0x4] sm:$0xf]
    %v154 = vunpack.c.l.b16 %v150
    %v155 = vunpack.c.l.b16 %v151
    %v156 = vpack.c.b16 %v154, %v154
    %v157 = vpack.c.b16 %v155, %v155
    %v159 = vshrl.u32 %v156, 16
    %v161 = vshll.u32 %v156, 16
    %v163 = vrot.slane %v161, 1
    %v164 = vor.u32 %v159, %v163
    %v166 = vshrl.u32 %v157, 16
    %v168 = vshll.u32 %v157, 16
    %v170 = vrot.slane %v168, 1
    %v171 = vor.u32 %v166, %v170
    %172 = vrot.lane.b32.xlu0 %v164, 32
    %v173 = vpop.permute.xlu0 %172
    %174 = vrot.lane.b32.xlu0 %v171, 32
    %v175 = vpop.permute.xlu0 %174
    %vm176 = vcmask 130048
    %vm179 = vcmask 261120
    %v181 = vsel %vm179, %v150, %v173
    %v183 = vsel %vm179, %v151, %v175
    %v186 = vrot.slane %v181, 1
    %v187 = vrot.slane %v181, 2
    %v188 = vrot.slane %v181, 3
    %v189 = vrot.slane %v183, 1
    %v190 = vrot.slane %v183, 2
    %v191 = vrot.slane %v183, 3
    %v192 = vunpack.i.l.s16 %v181
    %v193 = vunpack.i.h.s16 %v181
    %v194 = vunpack.i.l.s16 %v186
    %v195 = vunpack.i.h.s16 %v186
    %v196 = vunpack.i.l.s16 %v187
    %v197 = vunpack.i.h.s16 %v187
    %v198 = vunpack.i.l.s16 %v188
    %v199 = vunpack.i.l.s16 %v183
    %v200 = vunpack.i.h.s16 %v183
    %v201 = vunpack.i.l.s16 %v189
    %v202 = vunpack.i.h.s16 %v189
    %v203 = vunpack.i.l.s16 %v190
    %v204 = vunpack.i.h.s16 %v190
    %v205 = vunpack.i.l.s16 %v191
    %v206 = vld [vmem:[#allocation4] sm:$0xff]
    %v207 = vld [vmem:[#allocation4 + $0x8] sm:$0xf]
    %v208 = vld [vmem:[#allocation4 + $0xc] sm:$0xff]
    %v209 = vld [vmem:[#allocation4 + $0x14] sm:$0xf]
    %v210 = vld [vmem:[#allocation4 + $0x18] sm:$0xff]
    %v211 = vld [vmem:[#allocation4 + $0x20] sm:$0xf]
    %v212 = vld [vmem:[#allocation4 + $0x24] sm:$0xff]
    %v213 = vld [vmem:[#allocation4 + $0x2c] sm:$0xf]
    %v214 = vld [vmem:[#allocation4 + $0x30] sm:$0xff]
    %v215 = vld [vmem:[#allocation4 + $0x38] sm:$0xf]
    %v216 = vld [vmem:[#allocation4 + $0x3c] sm:$0xff]
    %v217 = vld [vmem:[#allocation4 + $0x44] sm:$0xf]
    %v218 = vpack.i.b16 %v193, %v192
    %v219 = vpack.i.b16 %v195, %v194
    %v220 = vpack.i.b16 %v197, %v196
    %v221 = vpack.i.b16 %v199, %v198
    %v222 = vpack.i.b16 %v201, %v200
    %v223 = vpack.i.b16 %v203, %v202
    %v224 = vpack.i.b16 %v205, %v204
    %226 = vst [vmem:[#allocation1] ss:$9 sm:$0xff] %v218
    %s228 = scalar_lea.vmem [#allocation1], 1
    %229 = vst [vmem:[%s228] ss:$9 sm:$0xff] %v219
    %s231 = scalar_lea.vmem [#allocation1], 2
    %232 = vst [vmem:[%s231] ss:$9 sm:$0xff] %v220
    %s234 = scalar_lea.vmem [#allocation1], 3
    %235 = vst [vmem:[%s234] ss:$9 sm:$0xff] %v221
    %s237 = scalar_lea.vmem [#allocation1], 4
    %238 = vst [vmem:[%s237] ss:$9 sm:$0xff] %v222
    %s240 = scalar_lea.vmem [#allocation1], 5
    %241 = vst [vmem:[%s240] ss:$9 sm:$0xff] %v223
    %s243 = scalar_lea.vmem [#allocation1], 6
    %244 = vst [vmem:[%s243] ss:$9 sm:$0xff] %v224
    %v245 = vld [vmem:[#allocation1] sm:$0xff]
    %v258 = vunpack.c.l.b16 %v206
    %v259 = vunpack.c.h.b16 %v206
    %v260 = vunpack.c.l.b16 %v207
    %v261 = vunpack.c.l.b16 %v208
    %v262 = vunpack.c.h.b16 %v208
    %v263 = vunpack.c.l.b16 %v209
    %v264 = vunpack.c.l.b16 %v210
    %v265 = vunpack.c.h.b16 %v210
    %v266 = vunpack.c.l.b16 %v211
    %v267 = vunpack.c.l.b16 %v212
    %v268 = vunpack.c.h.b16 %v212
    %v269 = vunpack.c.l.b16 %v213
    %v270 = vunpack.c.l.b16 %v214
    %v271 = vunpack.c.h.b16 %v214
    %v272 = vunpack.c.l.b16 %v215
    %v273 = vunpack.c.l.b16 %v216
    %v274 = vunpack.c.h.b16 %v216
    %v275 = vunpack.c.l.b16 %v217
    %v276 = vpack.c.b16 %v261, %v258
    %v277 = vpack.c.b16 %v262, %v259
    %v278 = vpack.c.b16 %v263, %v260
    %v279 = vpack.c.b16 %v267, %v264
    %v280 = vpack.c.b16 %v268, %v265
    %v281 = vpack.c.b16 %v269, %v266
    %v282 = vpack.c.b16 %v273, %v270
    %v283 = vpack.c.b16 %v274, %v271
    %v284 = vpack.c.b16 %v275, %v272
    %vm294 = vcmask 392192
    %v295 = vsel %vm294, %v245, 0
    %297 = vmatpush.bf16.msra.mxu0 0
    %298 = vmatpush.bf16.msra.mxu0 0
    %299 = vmatpush.bf16.msra.mxu0 0
    %300 = vmatpush.bf16.msra.mxu0 0
    %301 = vmatpush.bf16.msra.mxu0 0
    %302 = vmatpush.bf16.msra.mxu0 %v282
    %303 = vmatpush.bf16.msra.mxu0 %v279
    %304 = vmatpush.bf16.msra.mxu0 %v276
    %305 = vmatmul.bf16.gmra.mxu0 %v295
    %v306 = vpop.f32.mrf.mxu0
    %v307 = vadd.f32 0.0, %v306
    %v308 = vpop.f32.mrf.mxu0
    %v309 = vadd.f32 0.0, %v308
    %310 = vdwg.mxu0
    %311 = vmatpush.bf16.msra.mxu0 0
    %312 = vmatpush.bf16.msra.mxu0 0
    %313 = vmatpush.bf16.msra.mxu0 0
    %314 = vmatpush.bf16.msra.mxu0 0
    %315 = vmatpush.bf16.msra.mxu0 0
    %316 = vmatpush.bf16.msra.mxu0 %v283
    %317 = vmatpush.bf16.msra.mxu0 %v280
    %318 = vmatpush.bf16.msra.mxu0 %v277
    %319 = vmatmul.bf16.gmra.mxu0 %v295
    %v320 = vpop.f32.mrf.mxu0
    %v321 = vadd.f32 0.0, %v320
    %v322 = vpop.f32.mrf.mxu0
    %v323 = vadd.f32 0.0, %v322
    %324 = vdwg.mxu0
    %325 = vmatpush.bf16.msra.mxu0 0
    %326 = vmatpush.bf16.msra.mxu0 0
    %327 = vmatpush.bf16.msra.mxu0 0
    %328 = vmatpush.bf16.msra.mxu0 0
    %329 = vmatpush.bf16.msra.mxu0 0
    %330 = vmatpush.bf16.msra.mxu0 %v284
    %331 = vmatpush.bf16.msra.mxu0 %v281
    %332 = vmatpush.bf16.msra.mxu0 %v278
    %333 = vmatmul.bf16.gmra.mxu0 %v295
    %v334 = vpop.f32.mrf.mxu0
    %v335 = vadd.f32 0.0, %v334
    %v336 = vpop.f32.mrf.mxu0
    %v337 = vadd.f32 0.0, %v336
    %338 = vdwg.mxu0
    %v339 = vld [vmem:[#allocation6] sm:$0x7]
    %v341 = vperm.slane %v339, 0
    %v342 = vperm.slane %v339, 1
    %v343 = vperm.slane %v339, 2
    %v347 = vmul.f32 %v307, %v341
    %v348 = vmul.f32 %v321, %v342
    %v349 = vmul.f32 %v335, %v343
    %v350 = vmul.f32 %v309, %v341
    %v351 = vmul.f32 %v323, %v342
    %v352 = vmul.f32 %v337, %v343
    %v353 = vld [vmem:[#allocation7] sm:$0x7]
    %v355 = vperm.slane %v353, 0
    %v356 = vperm.slane %v353, 1
    %v357 = vperm.slane %v353, 2
    %v361 = vadd.f32 %v347, %v355
    %v362 = vadd.f32 %v348, %v356
    %v363 = vadd.f32 %v349, %v357
    %v364 = vadd.f32 %v350, %v355
    %v365 = vadd.f32 %v351, %v356
    %v366 = vadd.f32 %v352, %v357
    %v367 = vmax.f32 %v361, 0.0
    %v368 = vmax.f32 %v362, 0.0
    %v369 = vmax.f32 %v363, 0.0
    %v370 = vmax.f32 %v364, 0.0
    %v371 = vmax.f32 %v365, 0.0
    %v372 = vmax.f32 %v366, 0.0
    %v373 = vunpack.c.l.bf16 %v150
    %v374 = vunpack.c.l.bf16 %v151
    %377 = vrot.lane.b32.xlu0 %v373, 112
    %v378 = vpop.permute.xlu0 %377
    %379 = vrot.lane.b32.xlu0 %v374, 112
    %v380 = vpop.permute.xlu0 %379
    %v383 = vmax.f32 %v373, %v378
    %v384 = vmax.f32 %v374, %v380
    %v385 = vpack.c.bf16 %v383, %v383
    %v386 = vpack.c.bf16 %v384, %v384
    %v387 = vunpack.c.l.bf16 %v385
    %v388 = vunpack.c.l.bf16 %v386
    %v389 = vrot.slane %v373, 1
    %v390 = vrot.slane %v374, 1
    %v393 = vmax.f32 %v387, %v389
    %v394 = vmax.f32 %v388, %v390
    %v395 = vpack.c.bf16 %v393, %v393
    %v396 = vpack.c.bf16 %v394, %v394
    %v399 = vrot.slane %v395, 3
    %v400 = vrot.slane %v396, 3
    %vm401 = vcmask 1040384
    %v404 = vsel %vm401, %v395, %v399
    %vm406 = vcmask 1041409
    %v407 = vsel %vm406, %v395, %v399
    %v409 = vrot.slane %v407, 1
    %vm410 = vcmask 1042434
    %v411 = vsel %vm410, %v395, %v399
    %v413 = vrot.slane %v411, 2
    %vm414 = vcmask 1043459
    %v415 = vsel %vm414, %v395, %v399
    %v417 = vrot.slane %v415, 3
    %v420 = vsel %vm401, %v396, %v400
    %v422 = vsel %vm406, %v396, %v400
    %v424 = vrot.slane %v422, 1
    %v425 = vsel %vm410, %v396, %v400
    %v427 = vrot.slane %v425, 2
    %v428 = vsel %vm414, %v396, %v400
    %v430 = vrot.slane %v428, 3
    %v431 = vunpack.i.l.s16 %v404
    %v432 = vunpack.i.h.s16 %v404
    %v433 = vunpack.i.l.s16 %v409
    %v434 = vunpack.i.h.s16 %v409
    %v435 = vunpack.i.l.s16 %v413
    %v436 = vunpack.i.h.s16 %v413
    %v437 = vunpack.i.l.s16 %v417
    %v438 = vunpack.i.l.s16 %v420
    %v439 = vunpack.i.h.s16 %v420
    %v440 = vunpack.i.l.s16 %v424
    %v441 = vunpack.i.h.s16 %v424
    %v442 = vunpack.i.l.s16 %v427
    %v443 = vunpack.i.h.s16 %v427
    %v444 = vunpack.i.l.s16 %v430
    %445 = vrot.lane.b32.xlu0 %v156, 112
    %v446 = vpop.permute.xlu0 %445
    %447 = vrot.lane.b32.xlu0 %v157, 112
    %v448 = vpop.permute.xlu0 %447
    %vm449 = vcmask 1043456
    %v451 = vsel %vm449, %v150, %v446
    %v453 = vsel %vm449, %v151, %v448
    %v454 = vld [vmem:[#allocation9] sm:$0xf]
    %v455 = vld [vmem:[#allocation9 + $0x4] sm:$0xf]
    %v458 = vunpack.c.l.b16 %v454
    %v459 = vunpack.c.l.b16 %v455
    %v460 = vpack.c.b16 %v459, %v458
    %v462 = vsel %vm176, %v451, 0
    %v464 = vsel %vm176, %v453, 0
    %466 = vmatpush.bf16.msra.mxu0 0
    %467 = vmatpush.bf16.msra.mxu0 0
    %468 = vmatpush.bf16.msra.mxu0 0
    %469 = vmatpush.bf16.msra.mxu0 0
    %470 = vmatpush.bf16.msra.mxu0 0
    %471 = vmatpush.bf16.msra.mxu0 0
    %472 = vmatpush.bf16.msra.mxu0 0
    %473 = vmatpush.bf16.msra.mxu0 %v460
    %474 = vmatmul.bf16.gmra.mxu0 %v462
    %v475 = vpop.f32.mrf.mxu0
    %v476 = vadd.f32 0.0, %v475
    %v477 = vpop.f32.mrf.mxu0
    %v478 = vadd.f32 0.0, %v477
    %479 = vmatmul.bf16.gmra.mxu0 %v464
    %v480 = vpop.f32.mrf.mxu0
    %v481 = vadd.f32 0.0, %v480
    %v482 = vpop.f32.mrf.mxu0
    %v483 = vadd.f32 0.0, %v482
    %484 = vdwg.mxu0
    %v485 = vld [vmem:[%s5] sm:$0x1]
    %v487 = vperm.slane %v485, 0
    %v489 = vmul.f32 %v476, %v487
    %v490 = vmul.f32 %v478, %v487
    %v491 = vmul.f32 %v481, %v487
    %v492 = vmul.f32 %v483, %v487
    %v493 = vld [vmem:[%s6] sm:$0x1]
    %v495 = vperm.slane %v493, 0
    %v497 = vadd.f32 %v489, %v495
    %v498 = vadd.f32 %v490, %v495
    %v499 = vadd.f32 %v491, %v495
    %v500 = vadd.f32 %v492, %v495
    %v501 = vmax.f32 %v497, 0.0
    %v502 = vmax.f32 %v498, 0.0
    %v503 = vmax.f32 %v499, 0.0
    %v504 = vmax.f32 %v500, 0.0
    %v505 = vpack.c.bf16 %v501, %v501
    %v506 = vpack.c.bf16 %v502, %v502
    %v507 = vpack.c.bf16 %v503, %v503
    %v508 = vpack.c.bf16 %v504, %v504
    %v511 = vunpack.c.l.b16 %v506
    %v512 = vunpack.c.l.b16 %v508
    %v513 = vpack.c.b16 %v511, %v511
    %v514 = vpack.c.b16 %v512, %v512
    %v516 = vshrl.u32 %v513, 16
    %v518 = vrot.slane %v516, 7
    %v519 = vshll.u32 %v513, 16
    %v521 = vor.u32 %v518, %v519
    %v523 = vshrl.u32 %v514, 16
    %v525 = vrot.slane %v523, 7
    %v526 = vshll.u32 %v514, 16
    %v528 = vor.u32 %v525, %v526
    %vm531 = vcmask 1040384
    %vm532 = vsmask.f32 256
    %vm533 = vmand %vm531, %vm532
    %v534 = vsel %vm533, 0, %v521
    %v535 = vsel %vm533, 0, %v528
    %v538 = vunpack.c.l.b16 %v505
    %v539 = vunpack.c.l.b16 %v507
    %v540 = vpack.c.b16 %v538, %v538
    %v541 = vpack.c.b16 %v539, %v539
    %v543 = vshrl.u32 %v540, 16
    %v545 = vshll.u32 %v540, 16
    %v547 = vrot.slane %v545, 1
    %v548 = vor.u32 %v543, %v547
    %v550 = vshrl.u32 %v541, 16
    %v552 = vshll.u32 %v541, 16
    %v554 = vrot.slane %v552, 1
    %v555 = vor.u32 %v550, %v554
    %vm558 = vcmask 1043456
    %vm559 = vsmask.f32 3328
    %vm560 = vmand %vm558, %vm559
    %v561 = vsel %vm560, %v548, 0
    %v562 = vsel %vm560, %v555, 0
    %563 = vrot.lane.b32.xlu0 %v540, 64
    %v564 = vpop.permute.xlu0 %563
    %565 = vrot.lane.b32.xlu0 %v541, 64
    %v566 = vpop.permute.xlu0 %565
    %vm567 = vcmask 523264
    %v570 = vsel %vm567, %v534, %v564
    %v573 = vsel %vm567, %v535, %v566
    %574 = vrot.lane.b32.xlu0 %v513, 64
    %v575 = vpop.permute.xlu0 %574
    %576 = vrot.lane.b32.xlu0 %v514, 64
    %v577 = vpop.permute.xlu0 %576
    %v580 = vsel %vm567, %v505, %v575
    %v583 = vsel %vm567, %v507, %v577
    %v588 = vrot.slane %v580, 4
    %v589 = vrot.slane %v561, 4
    %v590 = vrot.slane %v583, 4
    %v591 = vrot.slane %v562, 4
    %v593 = vsel %vm449, %v570, %v588
    %v597 = vsel %vm449, %v506, %v589
    %v599 = vsel %vm449, %v573, %v590
    %v603 = vsel %vm449, %v508, %v591
    %v604 = vld [vmem:[#allocation10] sm:$0xf]
    %v605 = vld [vmem:[#allocation10 + $0x4] sm:$0xf]
    %v606 = vld [vmem:[#allocation10 + $0x8] sm:$0xf]
    %v607 = vld [vmem:[#allocation10 + $0xc] sm:$0xf]
    %v608 = vld [vmem:[#allocation10 + $0x10] sm:$0xf]
    %v609 = vld [vmem:[#allocation10 + $0x14] sm:$0xf]
    %v610 = vld [vmem:[#allocation10 + $0x18] sm:$0xf]
    %v611 = vld [vmem:[#allocation10 + $0x1c] sm:$0xf]
    %v612 = vld [vmem:[#allocation10 + $0x20] sm:$0xf]
    %v613 = vld [vmem:[#allocation10 + $0x24] sm:$0xf]
    %v614 = vld [vmem:[#allocation10 + $0x28] sm:$0xf]
    %v615 = vld [vmem:[#allocation10 + $0x2c] sm:$0xf]
    %v616 = vld [vmem:[#allocation10 + $0x30] sm:$0xf]
    %v617 = vld [vmem:[#allocation10 + $0x34] sm:$0xf]
    %v618 = vld [vmem:[#allocation10 + $0x38] sm:$0xf]
    %v619 = vld [vmem:[#allocation10 + $0x3c] sm:$0xf]
    %v620 = vld [vmem:[#allocation10 + $0x40] sm:$0xf]
    %v621 = vld [vmem:[#allocation10 + $0x44] sm:$0xf]
    %v622 = vld [vmem:[#allocation10 + $0x48] sm:$0xf]
    %v623 = vld [vmem:[#allocation10 + $0x4c] sm:$0xf]
    %v624 = vld [vmem:[#allocation10 + $0x50] sm:$0xf]
    %v625 = vld [vmem:[#allocation10 + $0x54] sm:$0xf]
    %v626 = vld [vmem:[#allocation10 + $0x58] sm:$0xf]
    %v627 = vld [vmem:[#allocation10 + $0x5c] sm:$0xf]
    %v652 = vunpack.c.l.b16 %v604
    %v653 = vunpack.c.l.b16 %v605
    %v654 = vunpack.c.l.b16 %v606
    %v655 = vunpack.c.l.b16 %v607
    %v656 = vunpack.c.l.b16 %v608
    %v657 = vunpack.c.l.b16 %v609
    %v658 = vunpack.c.l.b16 %v610
    %v659 = vunpack.c.l.b16 %v611
    %v660 = vunpack.c.l.b16 %v612
    %v661 = vunpack.c.l.b16 %v613
    %v662 = vunpack.c.l.b16 %v614
    %v663 = vunpack.c.l.b16 %v615
    %v664 = vunpack.c.l.b16 %v616
    %v665 = vunpack.c.l.b16 %v617
    %v666 = vunpack.c.l.b16 %v618
    %v667 = vunpack.c.l.b16 %v619
    %v668 = vunpack.c.l.b16 %v620
    %v669 = vunpack.c.l.b16 %v621
    %v670 = vunpack.c.l.b16 %v622
    %v671 = vunpack.c.l.b16 %v623
    %v672 = vunpack.c.l.b16 %v624
    %v673 = vunpack.c.l.b16 %v625
    %v674 = vunpack.c.l.b16 %v626
    %v675 = vunpack.c.l.b16 %v627
    %v676 = vpack.c.b16 %v653, %v652
    %v677 = vpack.c.b16 %v655, %v654
    %v678 = vpack.c.b16 %v657, %v656
    %v679 = vpack.c.b16 %v659, %v658
    %v680 = vpack.c.b16 %v661, %v660
    %v681 = vpack.c.b16 %v663, %v662
    %v682 = vpack.c.b16 %v665, %v664
    %v683 = vpack.c.b16 %v667, %v666
    %v684 = vpack.c.b16 %v669, %v668
    %v685 = vpack.c.b16 %v671, %v670
    %v686 = vpack.c.b16 %v673, %v672
    %v687 = vpack.c.b16 %v675, %v674
    %v700 = vsel %vm567, %v597, 0
    %v702 = vsel %vm567, %v603, 0
    %704 = vmatpush.bf16.msra.mxu0 %v683
    %705 = vmatpush.bf16.msra.mxu0 %v682
    %706 = vmatpush.bf16.msra.mxu0 %v681
    %707 = vmatpush.bf16.msra.mxu0 %v680
    %708 = vmatpush.bf16.msra.mxu0 %v679
    %709 = vmatpush.bf16.msra.mxu0 %v678
    %710 = vmatpush.bf16.msra.mxu0 %v677
    %711 = vmatpush.bf16.msra.mxu0 %v676
    %712 = vmatmul.bf16.gmra.mxu0 %v593
    %v713 = vpop.f32.mrf.mxu0
    %v714 = vadd.f32 0.0, %v713
    %v715 = vpop.f32.mrf.mxu0
    %v716 = vadd.f32 0.0, %v715
    %717 = vmatmul.bf16.gmra.mxu0 %v599
    %v718 = vpop.f32.mrf.mxu0
    %v719 = vadd.f32 0.0, %v718
    %v720 = vpop.f32.mrf.mxu0
    %v721 = vadd.f32 0.0, %v720
    %722 = vdwg.mxu0
    %723 = vmatpush.bf16.msra.mxu0 0
    %724 = vmatpush.bf16.msra.mxu0 0
    %725 = vmatpush.bf16.msra.mxu0 0
    %726 = vmatpush.bf16.msra.mxu0 0
    %727 = vmatpush.bf16.msra.mxu0 %v687
    %728 = vmatpush.bf16.msra.mxu0 %v686
    %729 = vmatpush.bf16.msra.mxu0 %v685
    %730 = vmatpush.bf16.msra.mxu0 %v684
    %731 = vmatmul.bf16.gmra.mxu0 %v700
    %v732 = vpop.f32.mrf.mxu0
    %v733 = vadd.f32 %v714, %v732
    %v734 = vpop.f32.mrf.mxu0
    %v735 = vadd.f32 %v716, %v734
    %736 = vmatmul.bf16.gmra.mxu0 %v702
    %v737 = vpop.f32.mrf.mxu0
    %v738 = vadd.f32 %v719, %v737
    %v739 = vpop.f32.mrf.mxu0
    %v740 = vadd.f32 %v721, %v739
    %741 = vdwg.mxu0
    %v742 = vld [vmem:[%s8] sm:$0x1]
    %v744 = vperm.slane %v742, 0
    %v746 = vmul.f32 %v733, %v744
    %v747 = vmul.f32 %v735, %v744
    %v748 = vmul.f32 %v738, %v744
    %v749 = vmul.f32 %v740, %v744
    %v750 = vld [vmem:[%s9] sm:$0x1]
    %v752 = vperm.slane %v750, 0
    %v754 = vadd.f32 %v746, %v752
    %v755 = vadd.f32 %v747, %v752
    %v756 = vadd.f32 %v748, %v752
    %v757 = vadd.f32 %v749, %v752
    %v758 = vmax.f32 %v754, 0.0
    %v759 = vmax.f32 %v755, 0.0
    %v760 = vmax.f32 %v756, 0.0
    %v761 = vmax.f32 %v757, 0.0
    %v762 = vpack.c.bf16 %v758, %v758
    %v763 = vpack.c.bf16 %v759, %v759
    %v764 = vpack.c.bf16 %v760, %v760
    %v765 = vpack.c.bf16 %v761, %v761
    %v768 = vunpack.c.l.b16 %v763
    %v769 = vunpack.c.l.b16 %v765
    %v770 = vpack.c.b16 %v768, %v768
    %v771 = vpack.c.b16 %v769, %v769
    %772 = vrot.lane.b32.xlu0 %v770, 96
    %v773 = vpop.permute.xlu0 %772
    %774 = vrot.lane.b32.xlu0 %v771, 96
    %v775 = vpop.permute.xlu0 %774
    %v778 = vunpack.c.l.b16 %v762
    %v779 = vunpack.c.l.b16 %v764
    %v780 = vpack.c.b16 %v778, %v778
    %v781 = vpack.c.b16 %v779, %v779
    %v783 = vshrl.u32 %v780, 16
    %v785 = vshll.u32 %v780, 16
    %v787 = vrot.slane %v785, 1
    %v788 = vor.u32 %v783, %v787
    %v790 = vshrl.u32 %v781, 16
    %v792 = vshll.u32 %v781, 16
    %v794 = vrot.slane %v792, 1
    %v795 = vor.u32 %v790, %v794
    %796 = vrot.lane.b32.xlu0 %v788, 64
    %v797 = vpop.permute.xlu0 %796
    %798 = vrot.lane.b32.xlu0 %v795, 64
    %v799 = vpop.permute.xlu0 %798
    %vm800 = vcmask 785408
    %v803 = vsel %vm800, %v762, %v773
    %v806 = vsel %vm800, %v764, %v775
    %v808 = vsel %vm567, %v773, %v797
    %v810 = vsel %vm567, %v775, %v799
    %v813 = vrot.slane %v808, 7
    %v814 = vrot.slane %v797, 6
    %v815 = vrot.slane %v810, 7
    %v816 = vrot.slane %v799, 6
    %v818 = vsel %vm401, %v803, %v813
    %vm819 = vcmask 1041408
    %v821 = vsel %vm819, %v818, %v814
    %v823 = vsel %vm406, %v803, %v813
    %vm824 = vcmask 1042433
    %v825 = vsel %vm824, %v823, %v814
    %v827 = vrot.slane %v825, 1
    %v828 = vsel %vm410, %v803, %v813
    %vm829 = vcmask 1043458
    %v830 = vsel %vm829, %v828, %v814
    %v832 = vrot.slane %v830, 2
    %v833 = vsel %vm414, %v803, %v813
    %vm834 = vcmask 1044483
    %v835 = vsel %vm834, %v833, %v814
    %v837 = vrot.slane %v835, 3
    %v839 = vsel %vm401, %v806, %v815
    %v841 = vsel %vm819, %v839, %v816
    %v843 = vsel %vm406, %v806, %v815
    %v844 = vsel %vm824, %v843, %v816
    %v846 = vrot.slane %v844, 1
    %v847 = vsel %vm410, %v806, %v815
    %v848 = vsel %vm829, %v847, %v816
    %v850 = vrot.slane %v848, 2
    %v851 = vsel %vm414, %v806, %v815
    %v852 = vsel %vm834, %v851, %v816
    %v854 = vrot.slane %v852, 3
    %v855 = vunpack.i.l.s16 %v821
    %v856 = vunpack.i.h.s16 %v821
    %v857 = vunpack.i.l.s16 %v827
    %v858 = vunpack.i.h.s16 %v827
    %v859 = vunpack.i.l.s16 %v832
    %v860 = vunpack.i.h.s16 %v832
    %v861 = vunpack.i.l.s16 %v837
    %v862 = vunpack.i.l.s16 %v841
    %v863 = vunpack.i.h.s16 %v841
    %v864 = vunpack.i.l.s16 %v846
    %v865 = vunpack.i.h.s16 %v846
    %v866 = vunpack.i.l.s16 %v850
    %v867 = vunpack.i.h.s16 %v850
    %v868 = vunpack.i.l.s16 %v854
    %v869 = vld [vmem:[#allocation12] sm:$0xf]
    %v870 = vld [vmem:[#allocation12 + $0x4] sm:$0xf]
    %v871 = vld [vmem:[#allocation12 + $0x8] sm:$0xf]
    %v872 = vld [vmem:[#allocation12 + $0xc] sm:$0xf]
    %v873 = vld [vmem:[#allocation12 + $0x10] sm:$0xf]
    %v874 = vld [vmem:[#allocation12 + $0x14] sm:$0xf]
    %v875 = vld [vmem:[#allocation12 + $0x18] sm:$0xf]
    %v876 = vld [vmem:[#allocation12 + $0x1c] sm:$0xf]
    %v877 = vld [vmem:[#allocation12 + $0x20] sm:$0xf]
    %v878 = vld [vmem:[#allocation12 + $0x24] sm:$0xf]
    %v879 = vld [vmem:[#allocation12 + $0x28] sm:$0xf]
    %v880 = vld [vmem:[#allocation12 + $0x2c] sm:$0xf]
    %v881 = vld [vmem:[#allocation12 + $0x30] sm:$0xf]
    %v882 = vld [vmem:[#allocation12 + $0x34] sm:$0xf]
    %v883 = vld [vmem:[#allocation12 + $0x38] sm:$0xf]
    %v884 = vld [vmem:[#allocation12 + $0x3c] sm:$0xf]
    %v885 = vld [vmem:[#allocation12 + $0x40] sm:$0xf]
    %v886 = vld [vmem:[#allocation12 + $0x44] sm:$0xf]
    %v887 = vld [vmem:[#allocation12 + $0x48] sm:$0xf]
    %v888 = vld [vmem:[#allocation12 + $0x4c] sm:$0xf]
    %v889 = vld [vmem:[#allocation12 + $0x50] sm:$0xf]
    %v890 = vld [vmem:[#allocation12 + $0x54] sm:$0xf]
    %v891 = vld [vmem:[#allocation12 + $0x58] sm:$0xf]
    %v892 = vld [vmem:[#allocation12 + $0x5c] sm:$0xf]
    %v893 = vld [vmem:[#allocation12 + $0x60] sm:$0xf]
    %v894 = vld [vmem:[#allocation12 + $0x64] sm:$0xf]
    %v895 = vld [vmem:[#allocation12 + $0x68] sm:$0xf]
    %v896 = vld [vmem:[#allocation12 + $0x6c] sm:$0xf]
    %v897 = vld [vmem:[#allocation12 + $0x70] sm:$0xf]
    %v898 = vld [vmem:[#allocation12 + $0x74] sm:$0xf]
    %v899 = vld [vmem:[#allocation12 + $0x78] sm:$0xf]
    %v900 = vld [vmem:[#allocation12 + $0x7c] sm:$0xf]
    %v901 = vld [vmem:[#allocation12 + $0x80] sm:$0xf]
    %v902 = vld [vmem:[#allocation12 + $0x84] sm:$0xf]
    %v903 = vld [vmem:[#allocation12 + $0x88] sm:$0xf]
    %v904 = vld [vmem:[#allocation12 + $0x8c] sm:$0xf]
    %v905 = vpack.i.b16 %v856, %v855
    %v906 = vpack.i.b16 %v858, %v857
    %v907 = vpack.i.b16 %v860, %v859
    %v908 = vpack.i.b16 %v862, %v861
    %v909 = vpack.i.b16 %v864, %v863
    %v910 = vpack.i.b16 %v866, %v865
    %v911 = vpack.i.b16 %v868, %v867
    %913 = vst [vmem:[#allocation1] ss:$9 sm:$0xff] %v905
    %s915 = scalar_lea.vmem [#allocation1], 1
    %916 = vst [vmem:[%s915] ss:$9 sm:$0xff] %v906
    %s918 = scalar_lea.vmem [#allocation1], 2
    %919 = vst [vmem:[%s918] ss:$9 sm:$0xff] %v907
    %s921 = scalar_lea.vmem [#allocation1], 3
    %922 = vst [vmem:[%s921] ss:$9 sm:$0xff] %v908
    %s924 = scalar_lea.vmem [#allocation1], 4
    %925 = vst [vmem:[%s924] ss:$9 sm:$0xff] %v909
    %s927 = scalar_lea.vmem [#allocation1], 5
    %928 = vst [vmem:[%s927] ss:$9 sm:$0xff] %v910
    %s930 = scalar_lea.vmem [#allocation1], 6
    %931 = vst [vmem:[%s930] ss:$9 sm:$0xff] %v911
    %v932 = vld [vmem:[#allocation1] sm:$0xff]
    %v933 = vld [vmem:[#allocation1 + $0x9] sm:$0xff]
    %v934 = vld [vmem:[#allocation1 + $0x12] sm:$0xff]
    %v973 = vunpack.c.l.b16 %v869
    %v974 = vunpack.c.l.b16 %v870
    %v975 = vunpack.c.l.b16 %v871
    %v976 = vunpack.c.l.b16 %v872
    %v977 = vunpack.c.l.b16 %v873
    %v978 = vunpack.c.l.b16 %v874
    %v979 = vunpack.c.l.b16 %v875
    %v980 = vunpack.c.l.b16 %v876
    %v981 = vunpack.c.l.b16 %v877
    %v982 = vunpack.c.l.b16 %v878
    %v983 = vunpack.c.l.b16 %v879
    %v984 = vunpack.c.l.b16 %v880
    %v985 = vunpack.c.l.b16 %v881
    %v986 = vunpack.c.l.b16 %v882
    %v987 = vunpack.c.l.b16 %v883
    %v988 = vunpack.c.l.b16 %v884
    %v989 = vunpack.c.l.b16 %v885
    %v990 = vunpack.c.l.b16 %v886
    %v991 = vunpack.c.l.b16 %v887
    %v992 = vunpack.c.l.b16 %v888
    %v993 = vunpack.c.l.b16 %v889
    %v994 = vunpack.c.l.b16 %v890
    %v995 = vunpack.c.l.b16 %v891
    %v996 = vunpack.c.l.b16 %v892
    %v997 = vunpack.c.l.b16 %v893
    %v998 = vunpack.c.l.b16 %v894
    %v999 = vunpack.c.l.b16 %v895
    %v1000 = vunpack.c.l.b16 %v896
    %v1001 = vunpack.c.l.b16 %v897
    %v1002 = vunpack.c.l.b16 %v898
    %v1003 = vunpack.c.l.b16 %v899
    %v1004 = vunpack.c.l.b16 %v900
    %v1005 = vunpack.c.l.b16 %v901
    %v1006 = vunpack.c.l.b16 %v902
    %v1007 = vunpack.c.l.b16 %v903
    %v1008 = vunpack.c.l.b16 %v904
    %v1009 = vpack.c.b16 %v974, %v973
    %v1010 = vpack.c.b16 %v976, %v975
    %v1011 = vpack.c.b16 %v978, %v977
    %v1012 = vpack.c.b16 %v980, %v979
    %v1013 = vpack.c.b16 %v982, %v981
    %v1014 = vpack.c.b16 %v984, %v983
    %v1015 = vpack.c.b16 %v986, %v985
    %v1016 = vpack.c.b16 %v988, %v987
    %v1017 = vpack.c.b16 %v990, %v989
    %v1018 = vpack.c.b16 %v992, %v991
    %v1019 = vpack.c.b16 %v994, %v993
    %v1020 = vpack.c.b16 %v996, %v995
    %v1021 = vpack.c.b16 %v998, %v997
    %v1022 = vpack.c.b16 %v1000, %v999
    %v1023 = vpack.c.b16 %v1002, %v1001
    %v1024 = vpack.c.b16 %v1004, %v1003
    %v1025 = vpack.c.b16 %v1006, %v1005
    %v1026 = vpack.c.b16 %v1008, %v1007
    %v1045 = vsel %vm179, %v934, 0
    %1047 = vmatpush.bf16.msra.mxu0 %v1016
    %1048 = vmatpush.bf16.msra.mxu0 %v1015
    %1049 = vmatpush.bf16.msra.mxu0 %v1014
    %1050 = vmatpush.bf16.msra.mxu0 %v1013
    %1051 = vmatpush.bf16.msra.mxu0 %v1012
    %1052 = vmatpush.bf16.msra.mxu0 %v1011
    %1053 = vmatpush.bf16.msra.mxu0 %v1010
    %1054 = vmatpush.bf16.msra.mxu0 %v1009
    %1055 = vmatmul.bf16.gmra.mxu0 %v932
    %v1056 = vpop.f32.mrf.mxu0
    %v1057 = vadd.f32 0.0, %v1056
    %v1058 = vpop.f32.mrf.mxu0
    %v1059 = vadd.f32 0.0, %v1058
    %1060 = vdwg.mxu0
    %1061 = vmatpush.bf16.msra.mxu0 %v1024
    %1062 = vmatpush.bf16.msra.mxu0 %v1023
    %1063 = vmatpush.bf16.msra.mxu0 %v1022
    %1064 = vmatpush.bf16.msra.mxu0 %v1021
    %1065 = vmatpush.bf16.msra.mxu0 %v1020
    %1066 = vmatpush.bf16.msra.mxu0 %v1019
    %1067 = vmatpush.bf16.msra.mxu0 %v1018
    %1068 = vmatpush.bf16.msra.mxu0 %v1017
    %1069 = vmatmul.bf16.gmra.mxu0 %v933
    %v1070 = vpop.f32.mrf.mxu0
    %v1071 = vadd.f32 %v1057, %v1070
    %v1072 = vpop.f32.mrf.mxu0
    %v1073 = vadd.f32 %v1059, %v1072
    %1074 = vdwg.mxu0
    %1075 = vmatpush.bf16.msra.mxu0 0
    %1076 = vmatpush.bf16.msra.mxu0 0
    %1077 = vmatpush.bf16.msra.mxu0 0
    %1078 = vmatpush.bf16.msra.mxu0 0
    %1079 = vmatpush.bf16.msra.mxu0 0
    %1080 = vmatpush.bf16.msra.mxu0 0
    %1081 = vmatpush.bf16.msra.mxu0 %v1026
    %1082 = vmatpush.bf16.msra.mxu0 %v1025
    %1083 = vmatmul.bf16.gmra.mxu0 %v1045
    %v1084 = vpop.f32.mrf.mxu0
    %v1085 = vadd.f32 %v1071, %v1084
    %v1086 = vpop.f32.mrf.mxu0
    %v1087 = vadd.f32 %v1073, %v1086
    %1088 = vdwg.mxu0
    %v1089 = vld [vmem:[%s11] sm:$0x1]
    %v1091 = vperm.slane %v1089, 0
    %v1093 = vmul.f32 %v1085, %v1091
    %v1094 = vmul.f32 %v1087, %v1091
    %v1095 = vld [vmem:[%s12] sm:$0x1]
    %v1097 = vperm.slane %v1095, 0
    %v1099 = vadd.f32 %v1093, %v1097
    %v1100 = vadd.f32 %v1094, %v1097
    %v1101 = vmax.f32 %v1099, 0.0
    %v1102 = vmax.f32 %v1100, 0.0
    %v1109 = vrot.slane %v368, 7
    %v1110 = vrot.slane %v369, 6
    %v1111 = vrot.slane %v371, 7
    %v1112 = vrot.slane %v372, 6
    %v1113 = vsel %vm401, %v367, %v1109
    %v1114 = vsel %vm819, %v1113, %v1110
    %v1115 = vsel %vm406, %v367, %v1109
    %v1116 = vsel %vm824, %v1115, %v1110
    %v1117 = vrot.slane %v1116, 1
    %v1118 = vsel %vm410, %v367, %v1109
    %v1119 = vsel %vm829, %v1118, %v1110
    %v1120 = vrot.slane %v1119, 2
    %v1121 = vsel %vm414, %v367, %v1109
    %v1122 = vsel %vm834, %v1121, %v1110
    %v1123 = vrot.slane %v1122, 3
    %vm1124 = vcmask 1044484
    %v1125 = vsel %vm1124, %v367, %v1109
    %vm1126 = vcmask 1045508
    %v1127 = vsel %vm1126, %v1125, %v1110
    %v1128 = vrot.slane %v1127, 4
    %vm1129 = vcmask 1045509
    %v1130 = vsel %vm1129, %v367, %v1109
    %vm1131 = vcmask 1046533
    %v1132 = vsel %vm1131, %v1130, %v1110
    %v1133 = vrot.slane %v1132, 5
    %vm1134 = vcmask 1046534
    %v1135 = vsel %vm1134, %v367, %v1109
    %vm1136 = vcmask 1045504
    %v1137 = vsel %vm1136, %v1110, %v1135
    %v1138 = vrot.slane %v1137, 6
    %vm1139 = vcmask 1046528
    %v1140 = vsel %vm1139, %v1109, %v367
    %vm1141 = vcmask 1046529
    %v1142 = vsel %vm1141, %v1110, %v1140
    %v1143 = vrot.slane %v1142, 7
    %v1144 = vsel %vm401, %v370, %v1111
    %v1145 = vsel %vm819, %v1144, %v1112
    %v1146 = vsel %vm406, %v370, %v1111
    %v1147 = vsel %vm824, %v1146, %v1112
    %v1148 = vrot.slane %v1147, 1
    %v1149 = vsel %vm410, %v370, %v1111
    %v1150 = vsel %vm829, %v1149, %v1112
    %v1151 = vrot.slane %v1150, 2
    %v1152 = vsel %vm414, %v370, %v1111
    %v1153 = vsel %vm834, %v1152, %v1112
    %v1154 = vrot.slane %v1153, 3
    %v1155 = vsel %vm1124, %v370, %v1111
    %v1156 = vsel %vm1126, %v1155, %v1112
    %v1157 = vrot.slane %v1156, 4
    %v1158 = vsel %vm1129, %v370, %v1111
    %v1159 = vsel %vm1131, %v1158, %v1112
    %v1160 = vrot.slane %v1159, 5
    %1161 = vst [vmem:[#allocation1] ss:$9 sm:$0xff] %v1114
    %s1162 = scalar_lea.vmem [#allocation1], 1
    %1163 = vst [vmem:[%s1162] ss:$9 sm:$0xff] %v1117
    %s1164 = scalar_lea.vmem [#allocation1], 2
    %1165 = vst [vmem:[%s1164] ss:$9 sm:$0xff] %v1120
    %s1166 = scalar_lea.vmem [#allocation1], 3
    %1167 = vst [vmem:[%s1166] ss:$9 sm:$0xff] %v1123
    %s1168 = scalar_lea.vmem [#allocation1], 4
    %1169 = vst [vmem:[%s1168] ss:$9 sm:$0xff] %v1128
    %s1170 = scalar_lea.vmem [#allocation1], 5
    %1171 = vst [vmem:[%s1170] ss:$9 sm:$0xff] %v1133
    %s1172 = scalar_lea.vmem [#allocation1], 6
    %1173 = vst [vmem:[%s1172] ss:$9 sm:$0xff] %v1138
    %v1174 = vld [vmem:[#allocation1] sm:$0xff]
    %v1175 = vld [vmem:[#allocation1 + $0x9] sm:$0xff]
    %v1176 = vld [vmem:[#allocation1 + $0x12] sm:$0xff]
    %1177 = vst [vmem:[#allocation1] ss:$9 sm:$0xff] %v1143
    %1178 = vst [vmem:[%s1162] ss:$9 sm:$0xff] %v1145
    %1179 = vst [vmem:[%s1164] ss:$9 sm:$0xff] %v1148
    %1180 = vst [vmem:[%s1166] ss:$9 sm:$0xff] %v1151
    %1181 = vst [vmem:[%s1168] ss:$9 sm:$0xff] %v1154
    %1182 = vst [vmem:[%s1170] ss:$9 sm:$0xff] %v1157
    %1183 = vst [vmem:[%s1172] ss:$9 sm:$0xff] %v1160
    %v1184 = vld [vmem:[#allocation1] sm:$0xff]
    %v1185 = vld [vmem:[#allocation1 + $0x9] sm:$0xff]
    %v1186 = vld [vmem:[#allocation1 + $0x12] sm:$0xff]
    %1193 = vst [vmem:[%s13] sm:$0x7f] %v1174
    %1194 = vst [vmem:[%s13 + $0x8] sm:$0x7f] %v1175
    %1195 = vst [vmem:[%s13 + $0x10] sm:$0x7f] %v1176
    %1196 = vst [vmem:[%s13 + $0x20] sm:$0x7f] %v1184
    %1197 = vst [vmem:[%s13 + $0x28] sm:$0x7f] %v1185
    %1198 = vst [vmem:[%s13 + $0x30] sm:$0x7f] %v1186
    %v1199 = vpack.i.b16 %v432, %v431
    %v1200 = vpack.i.b16 %v434, %v433
    %v1201 = vpack.i.b16 %v436, %v435
    %v1202 = vpack.i.b16 %v438, %v437
    %v1203 = vpack.i.b16 %v440, %v439
    %v1204 = vpack.i.b16 %v442, %v441
    %v1205 = vpack.i.b16 %v444, %v443
    %1207 = vst [vmem:[#allocation1] ss:$4 sm:$0xff] %v1199
    %s1209 = scalar_lea.vmem [#allocation1], 1
    %1210 = vst [vmem:[%s1209] ss:$4 sm:$0xff] %v1200
    %s1212 = scalar_lea.vmem [#allocation1], 2
    %1213 = vst [vmem:[%s1212] ss:$4 sm:$0xff] %v1201
    %s1215 = scalar_lea.vmem [#allocation1], 3
    %1216 = vst [vmem:[%s1215] ss:$4 sm:$0xff] %v1202
    %s1218 = scalar_lea.vmem [#allocation1], 32
    %1219 = vst [vmem:[%s1218] ss:$4 sm:$0xff] %v1203
    %s1221 = scalar_lea.vmem [#allocation1], 33
    %1222 = vst [vmem:[%s1221] ss:$4 sm:$0xff] %v1204
    %s1224 = scalar_lea.vmem [#allocation1], 34
    %1225 = vst [vmem:[%s1224] ss:$4 sm:$0xff] %v1205
    %v1226 = vld [vmem:[#allocation1] sm:$0xff]
    %v1227 = vld [vmem:[#allocation1 + $0x20] sm:$0xff]
    %v1230 = vunpack.c.l.bf16 %v1226
    %v1231 = vunpack.c.l.bf16 %v1227
    %1234 = vrot.lane.b32.xlu0 %v1230, 96
    %v1235 = vpop.permute.xlu0 %1234
    %1236 = vrot.lane.b32.xlu0 %v1231, 96
    %v1237 = vpop.permute.xlu0 %1236
    %v1240 = vsel %vm800, %v1101, %v1235
    %v1241 = vsel %vm800, %v1102, %v1237
    %vm1242 = vcmask 916480
    %v1243 = vsel %vm1242, %v1240, 0.0
    %v1244 = vsel %vm1242, %v1241, 0.0
    %v1247 = vrot.slane %v1243, 1
    %v1248 = vrot.slane %v1243, 2
    %v1249 = vrot.slane %v1243, 3
    %v1250 = vrot.slane %v1243, 4
    %v1251 = vrot.slane %v1243, 5
    %v1252 = vrot.slane %v1243, 6
    %v1253 = vrot.slane %v1243, 7
    %v1254 = vrot.slane %v1244, 1
    %v1255 = vrot.slane %v1244, 2
    %v1256 = vrot.slane %v1244, 3
    %v1257 = vrot.slane %v1244, 4
    %v1258 = vrot.slane %v1244, 5
    %1259 = vst [vmem:[#allocation1] ss:$9 sm:$0xff] %v1243
    %s1260 = scalar_lea.vmem [#allocation1], 1
    %1261 = vst [vmem:[%s1260] ss:$9 sm:$0xff] %v1247
    %s1262 = scalar_lea.vmem [#allocation1], 2
    %1263 = vst [vmem:[%s1262] ss:$9 sm:$0xff] %v1248
    %s1264 = scalar_lea.vmem [#allocation1], 3
    %1265 = vst [vmem:[%s1264] ss:$9 sm:$0xff] %v1249
    %s1266 = scalar_lea.vmem [#allocation1], 4
    %1267 = vst [vmem:[%s1266] ss:$9 sm:$0xff] %v1250
    %s1268 = scalar_lea.vmem [#allocation1], 5
    %1269 = vst [vmem:[%s1268] ss:$9 sm:$0xff] %v1251
    %s1270 = scalar_lea.vmem [#allocation1], 6
    %1271 = vst [vmem:[%s1270] ss:$9 sm:$0xff] %v1252
    %v1272 = vld [vmem:[#allocation1] sm:$0xff]
    %1273 = vst [vmem:[#allocation1] ss:$9 sm:$0xff] %v1253
    %1274 = vst [vmem:[%s1260] ss:$9 sm:$0xff] %v1244
    %1275 = vst [vmem:[%s1262] ss:$9 sm:$0xff] %v1254
    %1276 = vst [vmem:[%s1264] ss:$9 sm:$0xff] %v1255
    %1277 = vst [vmem:[%s1266] ss:$9 sm:$0xff] %v1256
    %1278 = vst [vmem:[%s1268] ss:$9 sm:$0xff] %v1257
    %1279 = vst [vmem:[%s1270] ss:$9 sm:$0xff] %v1258
    %v1280 = vld [vmem:[#allocation1] sm:$0xff]
    %1283 = vst [vmem:[%s13 + $0x18] sm:$0x7f] %v1272
    %1284 = vst [vmem:[%s13 + $0x38] sm:$0x7f] %v1280
    // Predicated region
    $region82: #{tpu_custom_call.1} parent=1 // pred_check
      _
    $region83: #{tpu_custom_call.1} parent=1 // pred_check_branch
      %1286 = sbr.rel (0) target = $region85
    $region84: #{tpu_custom_call.1} parent=1 // pred_region
      _
    $region85: #{tpu_custom_call.1} parent=1 // pred_fallthru
      _
    // Predicated region
    $region86: #{tpu_custom_call.1} parent=1 // pred_check
      _
    $region87: #{tpu_custom_call.1} parent=1 // pred_check_branch
      %1288 = sbr.rel (0) target = $region89
    $region88: #{tpu_custom_call.1} parent=1 // pred_region
      _
    $region89: #{tpu_custom_call.1} parent=1 // pred_fallthru
      _
    %1289 = vsyncpa [#allocation3], 1
    %1290 = vsyncpa [#allocation5], 1
    %1291 = vsyncpa [#allocation8], 1
    %1292 = vsyncpa [#allocation11], 1

</llo_original>
